<compile_context>
chip_gen: v5e
topology: v5e:2x2
jax: 0.10.0
libtpu: 0.0.40
codegen_flags: <defaults>
</compile_context>

<pallas_src>
import functools

import jax
import jax.numpy as jnp
from jax import lax
from jax.experimental import pallas as pl
from jax.experimental.pallas import tpu as pltpu

_MiB = 1024 * 1024


# ----------------------------------------------------------------------------
# Kernel
# ----------------------------------------------------------------------------
def _circle_loss_kernel(a_ref, p_ref, n_ref, gt_ref, o_ref, *,
                        scale, margin, eps, use_cos):
    """One (tb, D) batch tile; feature dim rides the 128-lane axis."""
    a = a_ref[...].astype(jnp.float32)
    p = p_ref[...].astype(jnp.float32)
    n = n_ref[...].astype(jnp.float32)

    dot_ap = jnp.sum(a * p, axis=-1, keepdims=True)          # (tb, 1)
    dot_an = jnp.sum(a * n, axis=-1, keepdims=True)          # (tb, 1)

    if use_cos:
        # max(sqrt(s), eps) == sqrt(max(s, eps^2)); rsqrt runs on the EUP slot.
        inv_a = lax.rsqrt(jnp.maximum(jnp.sum(a * a, axis=-1, keepdims=True), eps * eps))
        inv_p = lax.rsqrt(jnp.maximum(jnp.sum(p * p, axis=-1, keepdims=True), eps * eps))
        inv_n = lax.rsqrt(jnp.maximum(jnp.sum(n * n, axis=-1, keepdims=True), eps * eps))
        sim_pos = dot_ap * inv_a * inv_p
        sim_neg = dot_an * inv_a * inv_n
    else:
        sim_pos = dot_ap
        sim_neg = dot_an

    gt = gt_ref[...].astype(jnp.float32)                      # (tb, 2)
    gt_p = gt[:, 0:1]
    gt_n = gt[:, 1:2]

    alpha_p = jnp.maximum(1.0 + margin - sim_pos, 0.0) * gt_p
    alpha_n = jnp.maximum(sim_neg + margin, 0.0) * gt_n

    logit_p = -scale * alpha_p * (sim_pos - (1.0 - margin))
    logit_n = scale * alpha_n * (sim_neg - margin)

    z = logit_n + logit_p
    # Overflow-safe log(1 + exp(z)).
    o_ref[...] = jnp.maximum(z, 0.0) + jnp.log1p(jnp.exp(-jnp.abs(z)))


# ----------------------------------------------------------------------------
# Generation-aware configuration
# ----------------------------------------------------------------------------
def _tpu_memory_config():
    """Best-effort (vmem_limit_bytes, multi_core) for the current TPU gen."""
    phys = None
    try:
        info = pltpu.get_tpu_info()
        phys = int(getattr(info, "vmem_capacity_bytes", 0) or 0) or None
    except Exception:
        phys = None
    if phys is None:
        phys = 64 * _MiB  # conservative: assume v7x-class (64 MiB per TC, 2 TCs)
    if phys <= 64 * _MiB:
        # v7x-class: 64 MiB per TensorCore, 2 TensorCores per chip.
        limit = max(16 * _MiB, min(48 * _MiB, phys - 8 * _MiB))
        return limit, True
    # v5e / v6e: 128 MiB VMEM, single TensorCore.
    limit = max(48 * _MiB, min(100 * _MiB, phys - 16 * _MiB))
    return limit, False


def _choose_tb(B, D, itemsize, *, vmem_budget_bytes, multi_core):
    """Pick a batch tile size.

    Budget = 3 feature tensors x 2 pipeline buffers x (D * itemsize) input bytes
    per row, plus ~5 f32 x D working copies (the in-kernel f32 upcast of a/p/n
    and the elementwise products).  On multi-TC chips (v7x) prefer an even
    number of grid steps >= 2 so ("parallel",) shards evenly; on single-TC
    chips a single step is fine when everything fits one tile.
    """
    sub_align = {4: 8, 2: 16, 1: 32}.get(itemsize, 8)
    per_row = 3 * 2 * D * itemsize + 5 * 4 * D
    tb = max(sub_align, (vmem_budget_bytes // max(1, per_row)) // sub_align * sub_align)
    tb = min(tb, B)

    if multi_core and B > sub_align:
        steps = pl.cdiv(B, tb)
        if steps < 2 or steps % 2:
            steps = max(2, steps + (steps % 2))
            tb = pl.cdiv(pl.cdiv(B, steps), sub_align) * sub_align
            while pl.cdiv(B, tb) % 2 and tb > sub_align:
                tb -= sub_align
        tb = min(max(tb, sub_align), B)
    return tb


# ----------------------------------------------------------------------------
# Wrapper
# ----------------------------------------------------------------------------
def circle_loss(anchor, positive, negative,
                gt_anchor_positive, gt_anchor_negative, *,
                scale=16, margin=0.25, similarity='cos', eps=1e-8, tb=None):
    """Pallas CircleLoss forward. Returns the per-sample loss, shape (B,), f32."""
    if similarity not in ('cos', 'dot'):
        raise ValueError('This similarity is not implemented.')
    use_cos = (similarity == 'cos')

    B, D = anchor.shape
    itemsize = jnp.dtype(anchor.dtype).itemsize

    # Both gt masks travel in one small (B, 2) block (one tiny DMA per step).
    gt = jnp.stack(
        [jnp.reshape(gt_anchor_positive, (B,)).astype(jnp.float32),
         jnp.reshape(gt_anchor_negative, (B,)).astype(jnp.float32)], axis=-1)

    vmem_limit, multi_core = _tpu_memory_config()
    if tb is None:
        tb = _choose_tb(B, D, itemsize,
                        vmem_budget_bytes=int(vmem_limit * 0.6),
                        multi_core=multi_core)
    tb = int(min(tb, B))

    # TODO(synk): very large D (single-row tile > VMEM budget) would need a
    # feature-axis reduction grid; not needed for typical embedding sizes.

    kernel = functools.partial(
        _circle_loss_kernel, scale=float(scale), margin=float(margin),
        eps=float(eps), use_cos=use_cos)

    feat_spec = pl.BlockSpec((tb, D), lambda i: (i, 0))

    out = pl.pallas_call(
        kernel,
        out_shape=jax.ShapeDtypeStruct((B, 1), jnp.float32),
        grid_spec=pltpu.PrefetchScalarGridSpec(
            num_scalar_prefetch=0,
            grid=(pl.cdiv(B, tb),),            # partial last tile is masked by Pallas
            in_specs=[feat_spec, feat_spec, feat_spec,
                      pl.BlockSpec((tb, 2), lambda i: (i, 0))],
            out_specs=pl.BlockSpec((tb, 1), lambda i: (i, 0)),
        ),
        compiler_params=pltpu.CompilerParams(
            dimension_semantics=("parallel",),
            vmem_limit_bytes=int(vmem_limit)),
    )(anchor, positive, negative, gt)
    return out[:, 0]


# ----------------------------------------------------------------------------
# Reference + self-test
# ----------------------------------------------------------------------------
def _reference_circle_loss(anchor, positive, negative, gt_p, gt_n,
                           scale=16, margin=0.25, similarity='cos', eps=1e-8):
    anchor = anchor.astype(jnp.float32)
    positive = positive.astype(jnp.float32)
    negative = negative.astype(jnp.float32)
    if similarity == 'dot':
        sim_pos = jnp.sum(anchor * positive, axis=-1)
        sim_neg = jnp.sum(anchor * negative, axis=-1)
    else:
        def cos(x, y):
            nx = jnp.maximum(jnp.linalg.norm(x, axis=-1), eps)
            ny = jnp.maximum(jnp.linalg.norm(y, axis=-1), eps)
            return jnp.sum(x * y, axis=-1) / (nx * ny)
        sim_pos = cos(anchor, positive)
        sim_neg = cos(anchor, negative)
    alpha_p = jax.nn.relu(-sim_pos + 1 + margin) * gt_p
    alpha_n = jax.nn.relu(sim_neg + margin) * gt_n
    logit_p = -scale * alpha_p * (sim_pos - (1 - margin))
    logit_n = scale * alpha_n * (sim_neg - margin)
    return jnp.log(1 + jnp.exp(logit_n + logit_p))


if __name__ == "__main__":
    key = jax.random.PRNGKey(0)
    k1, k2, k3, k4, k5 = jax.random.split(key, 5)

    configs = [
        # (B, D, similarity, dtype, tol)
        (256, 32, 'cos', jnp.float32, 1e-4),    # small D: single (B, D) layout, no transposes
        (64, 256, 'cos', jnp.float32, 1e-4),    # feature dim on lanes
        (100, 48, 'cos', jnp.float32, 1e-4),    # non-divisible batch -> partial last tile
        (256, 32, 'dot', jnp.float32, 1e-4),    # dot-similarity path
        (128, 128, 'cos', jnp.bfloat16, 2e-3),  # bf16 inputs, f32 math in-kernel
    ]
    for (B, D, sim, dtype, tol) in configs:
        anchor = jax.random.normal(k1, (B, D), dtype=jnp.float32)
        positive = jax.random.normal(k2, (B, D), dtype=jnp.float32)
        negative = jax.random.normal(k3, (B, D), dtype=jnp.float32)
        if sim == 'dot':
            # keep logits in a non-overflowing range for the (unstable) reference
            anchor = anchor / jnp.linalg.norm(anchor, axis=-1, keepdims=True)
            positive = positive / jnp.linalg.norm(positive, axis=-1, keepdims=True)
            negative = negative / jnp.linalg.norm(negative, axis=-1, keepdims=True)
        anchor = anchor.astype(dtype)
        positive = positive.astype(dtype)
        negative = negative.astype(dtype)
        gt_p = (jax.random.uniform(k4, (B,)) > 0.2).astype(jnp.float32)
        gt_n = (jax.random.uniform(k5, (B,)) > 0.2).astype(jnp.float32)

        loss = circle_loss(anchor, positive, negative, gt_p, gt_n,
                           scale=16, margin=0.25, similarity=sim)
        loss = jax.block_until_ready(loss)

        ref = _reference_circle_loss(anchor, positive, negative, gt_p, gt_n,
                                     scale=16, margin=0.25, similarity=sim)
        assert loss.shape == (B,)
        assert jnp.allclose(loss, ref, atol=tol, rtol=tol), (B, D, sim, dtype, loss, ref)

    print("KERNEL_OK")
</pallas_src>

<mosaic_0001>
module attributes {stable_mosaic.version = 11 : i64} {
  func.func @_circle_loss_kernel(%arg0: i32, %arg1: memref<128x32xf32, #tpu.memory_space<vmem>>, %arg2: memref<128x32xf32, #tpu.memory_space<vmem>>, %arg3: memref<128x32xf32, #tpu.memory_space<vmem>>, %arg4: memref<128x2xf32, #tpu.memory_space<vmem>>, %arg5: memref<128x1xf32, #tpu.memory_space<vmem>>) attributes {dimension_semantics = [#tpu.dimension_semantics<parallel>], iteration_bounds = array<i64: 2>, scalar_prefetch = 0 : i64, scratch_operands = 0 : i64, tpu.core_type = #tpu.core_type<tc>, window_params = [{transform_indices = @transform_0, window_bounds = array<i64: 128, 32>}, {transform_indices = @transform_1, window_bounds = array<i64: 128, 32>}, {transform_indices = @transform_2, window_bounds = array<i64: 128, 32>}, {transform_indices = @transform_3, window_bounds = array<i64: 128, 2>}, {transform_indices = @transform_4, window_bounds = array<i64: 128, 1>}]} {
    %c0 = arith.constant 0 : index
    %c0_0 = arith.constant 0 : index
    %0 = vector.load %arg1[%c0, %c0_0] : memref<128x32xf32, #tpu.memory_space<vmem>>, vector<128x32xf32>
    %c0_1 = arith.constant 0 : index
    %c0_2 = arith.constant 0 : index
    %1 = vector.load %arg2[%c0_1, %c0_2] : memref<128x32xf32, #tpu.memory_space<vmem>>, vector<128x32xf32>
    %c0_3 = arith.constant 0 : index
    %c0_4 = arith.constant 0 : index
    %2 = vector.load %arg3[%c0_3, %c0_4] : memref<128x32xf32, #tpu.memory_space<vmem>>, vector<128x32xf32>
    %3 = arith.mulf %0, %1 : vector<128x32xf32>
    %cst = arith.constant dense<0.000000e+00> : vector<128xf32>
    %4 = vector.multi_reduction <add>, %3, %cst [1] : vector<128x32xf32> to vector<128xf32>
    %5 = vector.shape_cast %4 : vector<128xf32> to vector<128x1xf32>
    %6 = arith.mulf %0, %2 : vector<128x32xf32>
    %cst_5 = arith.constant dense<0.000000e+00> : vector<128xf32>
    %7 = vector.multi_reduction <add>, %6, %cst_5 [1] : vector<128x32xf32> to vector<128xf32>
    %8 = vector.shape_cast %7 : vector<128xf32> to vector<128x1xf32>
    %9 = arith.mulf %0, %0 : vector<128x32xf32>
    %cst_6 = arith.constant dense<0.000000e+00> : vector<128xf32>
    %10 = vector.multi_reduction <add>, %9, %cst_6 [1] : vector<128x32xf32> to vector<128xf32>
    %11 = vector.shape_cast %10 : vector<128xf32> to vector<128x1xf32>
    %cst_7 = arith.constant 1.000000e-16 : f32
    %12 = vector.broadcast %cst_7 : f32 to vector<128x1xf32>
    %13 = arith.maximumf %11, %12 : vector<128x1xf32>
    %14 = math.rsqrt %13 : vector<128x1xf32>
    %15 = arith.mulf %1, %1 : vector<128x32xf32>
    %cst_8 = arith.constant dense<0.000000e+00> : vector<128xf32>
    %16 = vector.multi_reduction <add>, %15, %cst_8 [1] : vector<128x32xf32> to vector<128xf32>
    %17 = vector.shape_cast %16 : vector<128xf32> to vector<128x1xf32>
    %cst_9 = arith.constant 1.000000e-16 : f32
    %18 = vector.broadcast %cst_9 : f32 to vector<128x1xf32>
    %19 = arith.maximumf %17, %18 : vector<128x1xf32>
    %20 = math.rsqrt %19 : vector<128x1xf32>
    %21 = arith.mulf %2, %2 : vector<128x32xf32>
    %cst_10 = arith.constant dense<0.000000e+00> : vector<128xf32>
    %22 = vector.multi_reduction <add>, %21, %cst_10 [1] : vector<128x32xf32> to vector<128xf32>
    %23 = vector.shape_cast %22 : vector<128xf32> to vector<128x1xf32>
    %cst_11 = arith.constant 1.000000e-16 : f32
    %24 = vector.broadcast %cst_11 : f32 to vector<128x1xf32>
    %25 = arith.maximumf %23, %24 : vector<128x1xf32>
    %26 = math.rsqrt %25 : vector<128x1xf32>
    %27 = arith.mulf %5, %14 : vector<128x1xf32>
    %28 = arith.mulf %27, %20 : vector<128x1xf32>
    %29 = arith.mulf %8, %14 : vector<128x1xf32>
    %30 = arith.mulf %29, %26 : vector<128x1xf32>
    %c0_12 = arith.constant 0 : index
    %c0_13 = arith.constant 0 : index
    %31 = vector.load %arg4[%c0_12, %c0_13] : memref<128x2xf32, #tpu.memory_space<vmem>>, vector<128x2xf32>
    %32 = vector.extract_strided_slice %31 {offsets = [0, 0], sizes = [128, 1], strides = [1, 1]} : vector<128x2xf32> to vector<128x1xf32>
    %33 = vector.extract_strided_slice %31 {offsets = [0, 1], sizes = [128, 1], strides = [1, 1]} : vector<128x2xf32> to vector<128x1xf32>
    %cst_14 = arith.constant 1.250000e+00 : f32
    %34 = vector.broadcast %cst_14 : f32 to vector<128x1xf32>
    %35 = arith.subf %34, %28 : vector<128x1xf32>
    %cst_15 = arith.constant 0.000000e+00 : f32
    %36 = vector.broadcast %cst_15 : f32 to vector<128x1xf32>
    %37 = arith.maximumf %35, %36 : vector<128x1xf32>
    %38 = arith.mulf %37, %32 : vector<128x1xf32>
    %cst_16 = arith.constant 2.500000e-01 : f32
    %39 = vector.broadcast %cst_16 : f32 to vector<128x1xf32>
    %40 = arith.addf %30, %39 : vector<128x1xf32>
    %cst_17 = arith.constant 0.000000e+00 : f32
    %41 = vector.broadcast %cst_17 : f32 to vector<128x1xf32>
    %42 = arith.maximumf %40, %41 : vector<128x1xf32>
    %43 = arith.mulf %42, %33 : vector<128x1xf32>
    %cst_18 = arith.constant -1.600000e+01 : f32
    %44 = vector.broadcast %cst_18 : f32 to vector<128x1xf32>
    %45 = arith.mulf %44, %38 : vector<128x1xf32>
    %cst_19 = arith.constant 7.500000e-01 : f32
    %46 = vector.broadcast %cst_19 : f32 to vector<128x1xf32>
    %47 = arith.subf %28, %46 : vector<128x1xf32>
    %48 = arith.mulf %45, %47 : vector<128x1xf32>
    %cst_20 = arith.constant 1.600000e+01 : f32
    %49 = vector.broadcast %cst_20 : f32 to vector<128x1xf32>
    %50 = arith.mulf %49, %43 : vector<128x1xf32>
    %cst_21 = arith.constant 2.500000e-01 : f32
    %51 = vector.broadcast %cst_21 : f32 to vector<128x1xf32>
    %52 = arith.subf %30, %51 : vector<128x1xf32>
    %53 = arith.mulf %50, %52 : vector<128x1xf32>
    %54 = arith.addf %53, %48 : vector<128x1xf32>
    %cst_22 = arith.constant 0.000000e+00 : f32
    %55 = vector.broadcast %cst_22 : f32 to vector<128x1xf32>
    %56 = arith.maximumf %54, %55 : vector<128x1xf32>
    %57 = math.absf %54 : vector<128x1xf32>
    %cst_23 = arith.constant 0.000000e+00 : f32
    %58 = vector.broadcast %cst_23 : f32 to vector<128x1xf32>
    %59 = arith.subf %58, %57 : vector<128x1xf32>
    %60 = math.exp %59 : vector<128x1xf32>
    %61 = math.log1p %60 : vector<128x1xf32>
    %62 = arith.addf %56, %61 : vector<128x1xf32>
    %c0_24 = arith.constant 0 : index
    %c0_25 = arith.constant 0 : index
    %63 = vector.load %arg5[%c0_24, %c0_25] : memref<128x1xf32, #tpu.memory_space<vmem>>, vector<128x1xf32>
    tpu.vector_store %arg5[%c0_24, %c0_25], %62 {strides = array<i32>} : memref<128x1xf32, #tpu.memory_space<vmem>>, vector<128x1xf32>,
    return
  }
  func.func @transform_0(%arg0: i32) -> (i32, i32) {
    %c0_i32 = arith.constant 0 : i32
    %c0_i32_0 = arith.constant 0 : i32
    return %arg0, %c0_i32 : i32, i32
  }
  func.func @transform_1(%arg0: i32) -> (i32, i32) {
    %c0_i32 = arith.constant 0 : i32
    %c0_i32_0 = arith.constant 0 : i32
    return %arg0, %c0_i32 : i32, i32
  }
  func.func @transform_2(%arg0: i32) -> (i32, i32) {
    %c0_i32 = arith.constant 0 : i32
    %c0_i32_0 = arith.constant 0 : i32
    return %arg0, %c0_i32 : i32, i32
  }
  func.func @transform_3(%arg0: i32) -> (i32, i32) {
    %c0_i32 = arith.constant 0 : i32
    %c0_i32_0 = arith.constant 0 : i32
    return %arg0, %c0_i32 : i32, i32
  }
  func.func @transform_4(%arg0: i32) -> (i32, i32) {
    %c0_i32 = arith.constant 0 : i32
    %c0_i32_0 = arith.constant 0 : i32
    return %arg0, %c0_i32 : i32, i32
  }
}

</mosaic_0001>

<llo_original>
// kernel: tpu_custom_call.1
$region0: #{tpu_custom_call.1}
  #allocation0 [shape = 'u32[]', space=smem, size = 0x4, offset = 0x4, fixed_abs, tag = 'smem constant byte address 0x4 - core index']
  #allocation1 [shape = 'u32[72,128]{1,0:T(1,128)}', space=vmem, size = 0x9000, scoped, tag = 'internal scratch']
  %s0 = inlined_call_operand.vmem [shape: f32[256,32], index: 0, kind: input, shape index: {}]
  %s1 = inlined_call_operand.vmem [shape: f32[256,32], index: 1, kind: input, shape index: {}]
  %s2 = inlined_call_operand.vmem [shape: f32[256,32], index: 2, kind: input, shape index: {}]
  %s3 = inlined_call_operand.vmem [shape: f32[256,2], index: 3, kind: input, shape index: {}]
  %s4 = inlined_call_operand.vmem [shape: f32[256,1], index: 4, kind: output, shape index: {}]
  %s5 = sld [smem:[#allocation0]]
  $region49: #{tpu_custom_call.1} parent=0
    _
  %s7 = ssub.s32 1, %s5
  %s8 = scalar_select 0, %s7, %s5
  loop: start=0, step=1, limit=4
  $region2: #{tpu_custom_call.1} parent=0 // loop_pre_header
    _
  $region3: #{tpu_custom_call.1} parent=0 // loop_header
    %s10 = sphi 0, %s14
    %p11 = scmp.ge.s32.totalorder %s10, 4
    %s20 = sphi 0, %s22
    %s23 = sphi 0, %s20
    %s24 = sphi 0, %s23
    %s40 = sphi 0, %s24
    %s46 = sphi 0, %s48
    %s49 = sphi 0, %s46
    %s50 = sphi 0, %s49
    %s66 = sphi 0, %s50
    %s72 = sphi 0, %s74
    %s75 = sphi 0, %s72
    %s76 = sphi 0, %s75
    %s92 = sphi 0, %s76
    %s98 = sphi 0, %s100
    %s101 = sphi 0, %s98
    %s102 = sphi 0, %s101
    %s118 = sphi 0, %s102
    %s124 = sphi 0, %s126
    %s127 = sphi 0, %s124
    %s128 = sphi 0, %s127
    %s144 = sphi 0, %s128
  $region4: #{tpu_custom_call.1} parent=0 // loop_header_branch
    %13 = sbr.rel (%p11) target = $region8
  $region5: #{tpu_custom_call.1} parent=0 // loop_body
    %s15 = ssub.s32 %s10, 1
    %s16 = ssub.s32 %s10, 2
    %s17 = sadd.s32 %s10, 1
    %s18 = ssub.s32 %s10, %s17
    %p19 = scmp.eq.s32.totalorder %s18, 0
    %s21 = sadd.s32 %s20, 1
    %s22 = scalar_select %p19, %s20, %s21
    %p25 = pneg %p19
    %p26 = scmp.eq.s32.totalorder %s10, 1
    %p27 = por %p25, %p26
    %p28 = scmp.ne.s32.totalorder %s20, %s23
    %p29 = scmp.eq.s32.totalorder %s10, 0
    %p30 = por %p28, %p29
    %p31 = scmp.ne.s32.totalorder %s20, %s23
    %p32 = scmp.eq.s32.totalorder %s15, 1
    %p33 = por %p31, %p32
    %p34 = scmp.ne.s32.totalorder %s23, %s24
    %p35 = scmp.eq.s32.totalorder %s15, 0
    %p36 = por %p34, %p35
    %p37 = scmp.ne.s32.totalorder %s23, %s24
    %p38 = scmp.eq.s32.totalorder %s16, 1
    %p39 = por %p37, %p38
    %p41 = scmp.ne.s32.totalorder %s24, %s40
    %p42 = scmp.eq.s32.totalorder %s16, 0
    %p43 = por %p41, %p42
    %s44 = ssub.s32 %s10, %s17
    %p45 = scmp.eq.s32.totalorder %s44, 0
    %s47 = sadd.s32 %s46, 1
    %s48 = scalar_select %p45, %s46, %s47
    %p51 = pneg %p45
    %p52 = scmp.eq.s32.totalorder %s10, 1
    %p53 = por %p51, %p52
    %p54 = scmp.ne.s32.totalorder %s46, %s49
    %p55 = scmp.eq.s32.totalorder %s10, 0
    %p56 = por %p54, %p55
    %p57 = scmp.ne.s32.totalorder %s46, %s49
    %p58 = scmp.eq.s32.totalorder %s15, 1
    %p59 = por %p57, %p58
    %p60 = scmp.ne.s32.totalorder %s49, %s50
    %p61 = scmp.eq.s32.totalorder %s15, 0
    %p62 = por %p60, %p61
    %p63 = scmp.ne.s32.totalorder %s49, %s50
    %p64 = scmp.eq.s32.totalorder %s16, 1
    %p65 = por %p63, %p64
    %p67 = scmp.ne.s32.totalorder %s50, %s66
    %p68 = scmp.eq.s32.totalorder %s16, 0
    %p69 = por %p67, %p68
    %s70 = ssub.s32 %s10, %s17
    %p71 = scmp.eq.s32.totalorder %s70, 0
    %s73 = sadd.s32 %s72, 1
    %s74 = scalar_select %p71, %s72, %s73
    %p77 = pneg %p71
    %p78 = scmp.eq.s32.totalorder %s10, 1
    %p79 = por %p77, %p78
    %p80 = scmp.ne.s32.totalorder %s72, %s75
    %p81 = scmp.eq.s32.totalorder %s10, 0
    %p82 = por %p80, %p81
    %p83 = scmp.ne.s32.totalorder %s72, %s75
    %p84 = scmp.eq.s32.totalorder %s15, 1
    %p85 = por %p83, %p84
    %p86 = scmp.ne.s32.totalorder %s75, %s76
    %p87 = scmp.eq.s32.totalorder %s15, 0
    %p88 = por %p86, %p87
    %p89 = scmp.ne.s32.totalorder %s75, %s76
    %p90 = scmp.eq.s32.totalorder %s16, 1
    %p91 = por %p89, %p90
    %p93 = scmp.ne.s32.totalorder %s76, %s92
    %p94 = scmp.eq.s32.totalorder %s16, 0
    %p95 = por %p93, %p94
    %s96 = ssub.s32 %s10, %s17
    %p97 = scmp.eq.s32.totalorder %s96, 0
    %s99 = sadd.s32 %s98, 1
    %s100 = scalar_select %p97, %s98, %s99
    %p103 = pneg %p97
    %p104 = scmp.eq.s32.totalorder %s10, 1
    %p105 = por %p103, %p104
    %p106 = scmp.ne.s32.totalorder %s98, %s101
    %p107 = scmp.eq.s32.totalorder %s10, 0
    %p108 = por %p106, %p107
    %p109 = scmp.ne.s32.totalorder %s98, %s101
    %p110 = scmp.eq.s32.totalorder %s15, 1
    %p111 = por %p109, %p110
    %p112 = scmp.ne.s32.totalorder %s101, %s102
    %p113 = scmp.eq.s32.totalorder %s15, 0
    %p114 = por %p112, %p113
    %p115 = scmp.ne.s32.totalorder %s101, %s102
    %p116 = scmp.eq.s32.totalorder %s16, 1
    %p117 = por %p115, %p116
    %p119 = scmp.ne.s32.totalorder %s102, %s118
    %p120 = scmp.eq.s32.totalorder %s16, 0
    %p121 = por %p119, %p120
    %s122 = ssub.s32 %s10, %s17
    %p123 = scmp.eq.s32.totalorder %s122, 0
    %s125 = sadd.s32 %s124, 1
    %s126 = scalar_select %p123, %s124, %s125
    %p129 = pneg %p123
    %p130 = scmp.eq.s32.totalorder %s10, 1
    %p131 = por %p129, %p130
    %p132 = scmp.ne.s32.totalorder %s124, %s127
    %p133 = scmp.eq.s32.totalorder %s10, 0
    %p134 = por %p132, %p133
    %p135 = scmp.ne.s32.totalorder %s124, %s127
    %p136 = scmp.eq.s32.totalorder %s15, 1
    %p137 = por %p135, %p136
    %p138 = scmp.ne.s32.totalorder %s127, %s128
    %p139 = scmp.eq.s32.totalorder %s15, 0
    %p140 = por %p138, %p139
    %p141 = scmp.ne.s32.totalorder %s127, %s128
    %p142 = scmp.eq.s32.totalorder %s16, 1
    %p143 = por %p141, %p142
    %p145 = scmp.ne.s32.totalorder %s128, %s144
    %p146 = scmp.eq.s32.totalorder %s16, 0
    %p147 = por %p145, %p146
    %p148 = scmp.le.s32.totalorder 1, %s10
    %p149 = scmp.lt.s32.totalorder %s10, 3
    %p150 = pnand %p148, %p149
    %p151 = pneg %p150
    // Predicated region
    $region9: #{tpu_custom_call.1} parent=5 // pred_check
      _
    $region10: #{tpu_custom_call.1} parent=5 // pred_check_branch
      %153 = sbr.rel (%p150) target = $region12
    $region11: #{tpu_custom_call.1} parent=5 // pred_region
      %s154 = ssub.s32 %s10, 1
    $region12: #{tpu_custom_call.1} parent=5 // pred_fallthru
      _
    %p155 = scmp.lt.s32.totalorder %s10, 2
    // Predicated region
    $region13: #{tpu_custom_call.1} parent=5 // pred_check
      %p156 = pneg %p155
    $region14: #{tpu_custom_call.1} parent=5 // pred_check_branch
      %158 = sbr.rel (%p156) target = $region16
    $region15: #{tpu_custom_call.1} parent=5 // pred_region
      // Predicated region
      $region17: #{tpu_custom_call.1} parent=15 // pred_check
        %p159 = pneg %p30
      $region18: #{tpu_custom_call.1} parent=15 // pred_check_branch
        %161 = sbr.rel (%p159) target = $region20
      $region19: #{tpu_custom_call.1} parent=15 // pred_region
        %s162 = smul.u32 16, %s10
        %p163 = scmp.lt.s32.totalorder %s162, 31
        %s164 = scalar_select %p163, %s162, 31
        %s165 = smul.addr %s164, 8
        %s166 = scalar_lea.vmem %s0, %s165
        %s167 = smul.u32 16, %s10
      $region20: #{tpu_custom_call.1} parent=15 // pred_fallthru
        _
      // Predicated region
      $region21: #{tpu_custom_call.1} parent=15 // pred_check
        %p168 = pneg %p56
      $region22: #{tpu_custom_call.1} parent=15 // pred_check_branch
        %170 = sbr.rel (%p168) target = $region24
      $region23: #{tpu_custom_call.1} parent=15 // pred_region
        %s171 = smul.u32 16, %s10
        %p172 = scmp.lt.s32.totalorder %s171, 31
        %s173 = scalar_select %p172, %s171, 31
        %s174 = smul.addr %s173, 8
        %s175 = scalar_lea.vmem %s1, %s174
        %s176 = smul.u32 16, %s10
      $region24: #{tpu_custom_call.1} parent=15 // pred_fallthru
        _
      // Predicated region
      $region25: #{tpu_custom_call.1} parent=15 // pred_check
        %p177 = pneg %p82
      $region26: #{tpu_custom_call.1} parent=15 // pred_check_branch
        %179 = sbr.rel (%p177) target = $region28
      $region27: #{tpu_custom_call.1} parent=15 // pred_region
        %s180 = smul.u32 16, %s10
        %p181 = scmp.lt.s32.totalorder %s180, 31
        %s182 = scalar_select %p181, %s180, 31
        %s183 = smul.addr %s182, 8
        %s184 = scalar_lea.vmem %s2, %s183
        %s185 = smul.u32 16, %s10
      $region28: #{tpu_custom_call.1} parent=15 // pred_fallthru
        _
      // Predicated region
      $region29: #{tpu_custom_call.1} parent=15 // pred_check
        %p186 = pneg %p108
      $region30: #{tpu_custom_call.1} parent=15 // pred_check_branch
        %188 = sbr.rel (%p186) target = $region32
      $region31: #{tpu_custom_call.1} parent=15 // pred_region
        %s189 = smul.u32 16, %s10
        %p190 = scmp.lt.s32.totalorder %s189, 31
        %s191 = scalar_select %p190, %s189, 31
        %s192 = smul.addr %s191, 8
        %s193 = scalar_lea.vmem %s3, %s192
        %s194 = smul.u32 16, %s10
      $region32: #{tpu_custom_call.1} parent=15 // pred_fallthru
        _
    $region16: #{tpu_custom_call.1} parent=5 // pred_fallthru
      _
    %p195 = scmp.le.s32.totalorder 1, %s10
    %p196 = scmp.lt.s32.totalorder %s10, 3
    %p197 = pnand %p195, %p196
    %p198 = pneg %p197
    // Predicated region
    $region33: #{tpu_custom_call.1} parent=5 // pred_check
      _
    $region34: #{tpu_custom_call.1} parent=5 // pred_check_branch
      %200 = sbr.rel (%p197) target = $region36
    $region35: #{tpu_custom_call.1} parent=5 // pred_region
      %s201 = ssub.s32 %s10, 1
      %s202 = smul.u32 16, %s15
      %p203 = scmp.lt.s32.totalorder %s202, 31
      %s204 = scalar_select %p203, %s202, 31
      %s205 = smul.addr %s204, 8
      %s206 = scalar_lea.vmem %s0, %s205
      %p207 = pneg %p36
      %p208 = pneg %p33
      %s209 = smul.u32 16, %s15
      %p210 = scmp.lt.s32.totalorder %s209, 31
      %s211 = scalar_select %p210, %s209, 31
      %s212 = smul.addr %s211, 8
      %s213 = scalar_lea.vmem %s1, %s212
      %p214 = pneg %p62
      %p215 = pneg %p59
      %s216 = smul.u32 16, %s15
      %p217 = scmp.lt.s32.totalorder %s216, 31
      %s218 = scalar_select %p217, %s216, 31
      %s219 = smul.addr %s218, 8
      %s220 = scalar_lea.vmem %s2, %s219
      %p221 = pneg %p88
      %p222 = pneg %p85
      %s223 = smul.u32 16, %s15
      %p224 = scmp.lt.s32.totalorder %s223, 31
      %s225 = scalar_select %p224, %s223, 31
      %s226 = smul.addr %s225, 8
      %s227 = scalar_lea.vmem %s3, %s226
      %p228 = pneg %p114
      %p229 = pneg %p111
      %p230 = pneg %p140
      %p231 = pneg %p137
      %s232 = smul.u32 16, %s15
      %p233 = scmp.lt.s32.totalorder %s232, 31
      %s234 = scalar_select %p233, %s232, 31
      %s235 = smul.addr %s234, 8
      %s236 = scalar_lea.vmem %s4, %s235
      %s237 = smul.u32 16, %s15
      %p238 = scmp.lt.s32.totalorder %s237, 31
      %s239 = scalar_select %p238, %s237, 31
      %s240 = smul.addr %s239, 8
      %s241 = scalar_lea.vmem %s0, %s240
      %s242 = smul.u32 16, %s15
      %s243 = smul.u32 16, %s15
      %p244 = scmp.lt.s32.totalorder %s243, 31
      %s245 = scalar_select %p244, %s243, 31
      %s246 = smul.addr %s245, 8
      %s247 = scalar_lea.vmem %s1, %s246
      %s248 = smul.u32 16, %s15
      %s249 = smul.u32 16, %s15
      %p250 = scmp.lt.s32.totalorder %s249, 31
      %s251 = scalar_select %p250, %s249, 31
      %s252 = smul.addr %s251, 8
      %s253 = scalar_lea.vmem %s2, %s252
      %s254 = smul.u32 16, %s15
      %s255 = smul.u32 16, %s15
      %p256 = scmp.lt.s32.totalorder %s255, 31
      %s257 = scalar_select %p256, %s255, 31
      %s258 = smul.addr %s257, 8
      %s259 = scalar_lea.vmem %s3, %s258
      %s260 = smul.u32 16, %s15
      %s261 = smul.u32 16, %s15
      %p262 = scmp.lt.s32.totalorder %s261, 31
      %s263 = scalar_select %p262, %s261, 31
      %s264 = smul.addr %s263, 8
      %s265 = scalar_lea.vmem %s4, %s264
      %s266 = smul.u32 16, %s15
      %v267 = vld [vmem:[%s241] sm:$0xff]
      %v268 = vld [vmem:[%s241 + $0x8] sm:$0xff]
      %v269 = vld [vmem:[%s241 + $0x10] sm:$0xff]
      %v270 = vld [vmem:[%s241 + $0x18] sm:$0xff]
      %v271 = vld [vmem:[%s241 + $0x20] sm:$0xff]
      %v272 = vld [vmem:[%s241 + $0x28] sm:$0xff]
      %v273 = vld [vmem:[%s241 + $0x30] sm:$0xff]
      %v274 = vld [vmem:[%s241 + $0x38] sm:$0xff]
      %v275 = vld [vmem:[%s241 + $0x40] sm:$0xff]
      %v276 = vld [vmem:[%s241 + $0x48] sm:$0xff]
      %v277 = vld [vmem:[%s241 + $0x50] sm:$0xff]
      %v278 = vld [vmem:[%s241 + $0x58] sm:$0xff]
      %v279 = vld [vmem:[%s241 + $0x60] sm:$0xff]
      %v280 = vld [vmem:[%s241 + $0x68] sm:$0xff]
      %v281 = vld [vmem:[%s241 + $0x70] sm:$0xff]
      %v282 = vld [vmem:[%s241 + $0x78] sm:$0xff]
      %v283 = vld [vmem:[%s247] sm:$0xff]
      %v284 = vld [vmem:[%s247 + $0x8] sm:$0xff]
      %v285 = vld [vmem:[%s247 + $0x10] sm:$0xff]
      %v286 = vld [vmem:[%s247 + $0x18] sm:$0xff]
      %v287 = vld [vmem:[%s247 + $0x20] sm:$0xff]
      %v288 = vld [vmem:[%s247 + $0x28] sm:$0xff]
      %v289 = vld [vmem:[%s247 + $0x30] sm:$0xff]
      %v290 = vld [vmem:[%s247 + $0x38] sm:$0xff]
      %v291 = vld [vmem:[%s247 + $0x40] sm:$0xff]
      %v292 = vld [vmem:[%s247 + $0x48] sm:$0xff]
      %v293 = vld [vmem:[%s247 + $0x50] sm:$0xff]
      %v294 = vld [vmem:[%s247 + $0x58] sm:$0xff]
      %v295 = vld [vmem:[%s247 + $0x60] sm:$0xff]
      %v296 = vld [vmem:[%s247 + $0x68] sm:$0xff]
      %v297 = vld [vmem:[%s247 + $0x70] sm:$0xff]
      %v298 = vld [vmem:[%s247 + $0x78] sm:$0xff]
      %v299 = vld [vmem:[%s253] sm:$0xff]
      %v300 = vld [vmem:[%s253 + $0x8] sm:$0xff]
      %v301 = vld [vmem:[%s253 + $0x10] sm:$0xff]
      %v302 = vld [vmem:[%s253 + $0x18] sm:$0xff]
      %v303 = vld [vmem:[%s253 + $0x20] sm:$0xff]
      %v304 = vld [vmem:[%s253 + $0x28] sm:$0xff]
      %v305 = vld [vmem:[%s253 + $0x30] sm:$0xff]
      %v306 = vld [vmem:[%s253 + $0x38] sm:$0xff]
      %v307 = vld [vmem:[%s253 + $0x40] sm:$0xff]
      %v308 = vld [vmem:[%s253 + $0x48] sm:$0xff]
      %v309 = vld [vmem:[%s253 + $0x50] sm:$0xff]
      %v310 = vld [vmem:[%s253 + $0x58] sm:$0xff]
      %v311 = vld [vmem:[%s253 + $0x60] sm:$0xff]
      %v312 = vld [vmem:[%s253 + $0x68] sm:$0xff]
      %v313 = vld [vmem:[%s253 + $0x70] sm:$0xff]
      %v314 = vld [vmem:[%s253 + $0x78] sm:$0xff]
      %v315 = vmul.f32 %v267, %v283
      %v316 = vmul.f32 %v268, %v284
      %v317 = vmul.f32 %v269, %v285
      %v318 = vmul.f32 %v270, %v286
      %v319 = vmul.f32 %v271, %v287
      %v320 = vmul.f32 %v272, %v288
      %v321 = vmul.f32 %v273, %v289
      %v322 = vmul.f32 %v274, %v290
      %v323 = vmul.f32 %v275, %v291
      %v324 = vmul.f32 %v276, %v292
      %v325 = vmul.f32 %v277, %v293
      %v326 = vmul.f32 %v278, %v294
      %v327 = vmul.f32 %v279, %v295
      %v328 = vmul.f32 %v280, %v296
      %v329 = vmul.f32 %v281, %v297
      %v330 = vmul.f32 %v282, %v298
      %vm331 = vcmask 261120
      %v332 = vsel %vm331, %v315, 0.0
      %333 = vadd.xlane.f32.xlu0 %v332
      %v334 = vpop.xlane.xlu0 %333
      %v335 = vsel %vm331, %v316, 0.0
      %336 = vadd.xlane.f32.xlu0 %v335
      %v337 = vpop.xlane.xlu0 %336
      %v338 = vsel %vm331, %v317, 0.0
      %339 = vadd.xlane.f32.xlu0 %v338
      %v340 = vpop.xlane.xlu0 %339
      %v341 = vsel %vm331, %v318, 0.0
      %342 = vadd.xlane.f32.xlu0 %v341
      %v343 = vpop.xlane.xlu0 %342
      %v344 = vsel %vm331, %v319, 0.0
      %345 = vadd.xlane.f32.xlu0 %v344
      %v346 = vpop.xlane.xlu0 %345
      %v347 = vsel %vm331, %v320, 0.0
      %348 = vadd.xlane.f32.xlu0 %v347
      %v349 = vpop.xlane.xlu0 %348
      %v350 = vsel %vm331, %v321, 0.0
      %351 = vadd.xlane.f32.xlu0 %v350
      %v352 = vpop.xlane.xlu0 %351
      %v353 = vsel %vm331, %v322, 0.0
      %354 = vadd.xlane.f32.xlu0 %v353
      %v355 = vpop.xlane.xlu0 %354
      %v356 = vsel %vm331, %v323, 0.0
      %357 = vadd.xlane.f32.xlu0 %v356
      %v358 = vpop.xlane.xlu0 %357
      %v359 = vsel %vm331, %v324, 0.0
      %360 = vadd.xlane.f32.xlu0 %v359
      %v361 = vpop.xlane.xlu0 %360
      %v362 = vsel %vm331, %v325, 0.0
      %363 = vadd.xlane.f32.xlu0 %v362
      %v364 = vpop.xlane.xlu0 %363
      %v365 = vsel %vm331, %v326, 0.0
      %366 = vadd.xlane.f32.xlu0 %v365
      %v367 = vpop.xlane.xlu0 %366
      %v368 = vsel %vm331, %v327, 0.0
      %369 = vadd.xlane.f32.xlu0 %v368
      %v370 = vpop.xlane.xlu0 %369
      %v371 = vsel %vm331, %v328, 0.0
      %372 = vadd.xlane.f32.xlu0 %v371
      %v373 = vpop.xlane.xlu0 %372
      %v374 = vsel %vm331, %v329, 0.0
      %375 = vadd.xlane.f32.xlu0 %v374
      %v376 = vpop.xlane.xlu0 %375
      %v377 = vsel %vm331, %v330, 0.0
      %378 = vadd.xlane.f32.xlu0 %v377
      %v379 = vpop.xlane.xlu0 %378
      %v380 = vmul.f32 %v267, %v299
      %v381 = vmul.f32 %v268, %v300
      %v382 = vmul.f32 %v269, %v301
      %v383 = vmul.f32 %v270, %v302
      %v384 = vmul.f32 %v271, %v303
      %v385 = vmul.f32 %v272, %v304
      %v386 = vmul.f32 %v273, %v305
      %v387 = vmul.f32 %v274, %v306
      %v388 = vmul.f32 %v275, %v307
      %v389 = vmul.f32 %v276, %v308
      %v390 = vmul.f32 %v277, %v309
      %v391 = vmul.f32 %v278, %v310
      %v392 = vmul.f32 %v279, %v311
      %v393 = vmul.f32 %v280, %v312
      %v394 = vmul.f32 %v281, %v313
      %v395 = vmul.f32 %v282, %v314
      %v396 = vsel %vm331, %v380, 0.0
      %397 = vadd.xlane.f32.xlu0 %v396
      %v398 = vpop.xlane.xlu0 %397
      %v399 = vsel %vm331, %v381, 0.0
      %400 = vadd.xlane.f32.xlu0 %v399
      %v401 = vpop.xlane.xlu0 %400
      %v402 = vsel %vm331, %v382, 0.0
      %403 = vadd.xlane.f32.xlu0 %v402
      %v404 = vpop.xlane.xlu0 %403
      %v405 = vsel %vm331, %v383, 0.0
      %406 = vadd.xlane.f32.xlu0 %v405
      %v407 = vpop.xlane.xlu0 %406
      %v408 = vsel %vm331, %v384, 0.0
      %409 = vadd.xlane.f32.xlu0 %v408
      %v410 = vpop.xlane.xlu0 %409
      %v411 = vsel %vm331, %v385, 0.0
      %412 = vadd.xlane.f32.xlu0 %v411
      %v413 = vpop.xlane.xlu0 %412
      %v414 = vsel %vm331, %v386, 0.0
      %415 = vadd.xlane.f32.xlu0 %v414
      %v416 = vpop.xlane.xlu0 %415
      %v417 = vsel %vm331, %v387, 0.0
      %418 = vadd.xlane.f32.xlu0 %v417
      %v419 = vpop.xlane.xlu0 %418
      %v420 = vsel %vm331, %v388, 0.0
      %421 = vadd.xlane.f32.xlu0 %v420
      %v422 = vpop.xlane.xlu0 %421
      %v423 = vsel %vm331, %v389, 0.0
      %424 = vadd.xlane.f32.xlu0 %v423
      %v425 = vpop.xlane.xlu0 %424
      %v426 = vsel %vm331, %v390, 0.0
      %427 = vadd.xlane.f32.xlu0 %v426
      %v428 = vpop.xlane.xlu0 %427
      %v429 = vsel %vm331, %v391, 0.0
      %430 = vadd.xlane.f32.xlu0 %v429
      %v431 = vpop.xlane.xlu0 %430
      %v432 = vsel %vm331, %v392, 0.0
      %433 = vadd.xlane.f32.xlu0 %v432
      %v434 = vpop.xlane.xlu0 %433
      %v435 = vsel %vm331, %v393, 0.0
      %436 = vadd.xlane.f32.xlu0 %v435
      %v437 = vpop.xlane.xlu0 %436
      %v438 = vsel %vm331, %v394, 0.0
      %439 = vadd.xlane.f32.xlu0 %v438
      %v440 = vpop.xlane.xlu0 %439
      %v441 = vsel %vm331, %v395, 0.0
      %442 = vadd.xlane.f32.xlu0 %v441
      %v443 = vpop.xlane.xlu0 %442
      %v444 = vmul.f32 %v267, %v267
      %v445 = vmul.f32 %v268, %v268
      %v446 = vmul.f32 %v269, %v269
      %v447 = vmul.f32 %v270, %v270
      %v448 = vmul.f32 %v271, %v271
      %v449 = vmul.f32 %v272, %v272
      %v450 = vmul.f32 %v273, %v273
      %v451 = vmul.f32 %v274, %v274
      %v452 = vmul.f32 %v275, %v275
      %v453 = vmul.f32 %v276, %v276
      %v454 = vmul.f32 %v277, %v277
      %v455 = vmul.f32 %v278, %v278
      %v456 = vmul.f32 %v279, %v279
      %v457 = vmul.f32 %v280, %v280
      %v458 = vmul.f32 %v281, %v281
      %v459 = vmul.f32 %v282, %v282
      %v460 = vsel %vm331, %v444, 0.0
      %461 = vadd.xlane.f32.xlu0 %v460
      %v462 = vpop.xlane.xlu0 %461
      %v463 = vsel %vm331, %v445, 0.0
      %464 = vadd.xlane.f32.xlu0 %v463
      %v465 = vpop.xlane.xlu0 %464
      %v466 = vsel %vm331, %v446, 0.0
      %467 = vadd.xlane.f32.xlu0 %v466
      %v468 = vpop.xlane.xlu0 %467
      %v469 = vsel %vm331, %v447, 0.0
      %470 = vadd.xlane.f32.xlu0 %v469
      %v471 = vpop.xlane.xlu0 %470
      %v472 = vsel %vm331, %v448, 0.0
      %473 = vadd.xlane.f32.xlu0 %v472
      %v474 = vpop.xlane.xlu0 %473
      %v475 = vsel %vm331, %v449, 0.0
      %476 = vadd.xlane.f32.xlu0 %v475
      %v477 = vpop.xlane.xlu0 %476
      %v478 = vsel %vm331, %v450, 0.0
      %479 = vadd.xlane.f32.xlu0 %v478
      %v480 = vpop.xlane.xlu0 %479
      %v481 = vsel %vm331, %v451, 0.0
      %482 = vadd.xlane.f32.xlu0 %v481
      %v483 = vpop.xlane.xlu0 %482
      %v484 = vsel %vm331, %v452, 0.0
      %485 = vadd.xlane.f32.xlu0 %v484
      %v486 = vpop.xlane.xlu0 %485
      %v487 = vsel %vm331, %v453, 0.0
      %488 = vadd.xlane.f32.xlu0 %v487
      %v489 = vpop.xlane.xlu0 %488
      %v490 = vsel %vm331, %v454, 0.0
      %491 = vadd.xlane.f32.xlu0 %v490
      %v492 = vpop.xlane.xlu0 %491
      %v493 = vsel %vm331, %v455, 0.0
      %494 = vadd.xlane.f32.xlu0 %v493
      %v495 = vpop.xlane.xlu0 %494
      %v496 = vsel %vm331, %v456, 0.0
      %497 = vadd.xlane.f32.xlu0 %v496
      %v498 = vpop.xlane.xlu0 %497
      %v499 = vsel %vm331, %v457, 0.0
      %500 = vadd.xlane.f32.xlu0 %v499
      %v501 = vpop.xlane.xlu0 %500
      %v502 = vsel %vm331, %v458, 0.0
      %503 = vadd.xlane.f32.xlu0 %v502
      %v504 = vpop.xlane.xlu0 %503
      %v505 = vsel %vm331, %v459, 0.0
      %506 = vadd.xlane.f32.xlu0 %v505
      %v507 = vpop.xlane.xlu0 %506
      %v508 = vmax.f32 %v462, 1e-16
      %v509 = vmax.f32 %v465, 1e-16
      %v510 = vmax.f32 %v468, 1e-16
      %v511 = vmax.f32 %v471, 1e-16
      %v512 = vmax.f32 %v474, 1e-16
      %v513 = vmax.f32 %v477, 1e-16
      %v514 = vmax.f32 %v480, 1e-16
      %v515 = vmax.f32 %v483, 1e-16
      %v516 = vmax.f32 %v486, 1e-16
      %v517 = vmax.f32 %v489, 1e-16
      %v518 = vmax.f32 %v492, 1e-16
      %v519 = vmax.f32 %v495, 1e-16
      %v520 = vmax.f32 %v498, 1e-16
      %v521 = vmax.f32 %v501, 1e-16
      %v522 = vmax.f32 %v504, 1e-16
      %v523 = vmax.f32 %v507, 1e-16
      %v524 = vrsqrt.pop %v508
      %v525 = vmul.f32 %v524, %v508
      %v526 = vmul.f32 %v525, %v524
      %v527 = vmul.f32 0.5, %v526
      %v528 = vsub.f32 1.5, %v527
      %v529 = vmul.f32 %v524, %v528
      %vm530 = vweird.f32 %v508
      %vm531 = vweird.f32 %v524
      %vm532 = vmor %vm530, %vm531
      %v533 = vsel %vm532, %v524, %v529
      %v534 = vrsqrt.pop %v509
      %v535 = vmul.f32 %v534, %v509
      %v536 = vmul.f32 %v535, %v534
      %v537 = vmul.f32 0.5, %v536
      %v538 = vsub.f32 1.5, %v537
      %v539 = vmul.f32 %v534, %v538
      %vm540 = vweird.f32 %v509
      %vm541 = vweird.f32 %v534
      %vm542 = vmor %vm540, %vm541
      %v543 = vsel %vm542, %v534, %v539
      %v544 = vrsqrt.pop %v510
      %v545 = vmul.f32 %v544, %v510
      %v546 = vmul.f32 %v545, %v544
      %v547 = vmul.f32 0.5, %v546
      %v548 = vsub.f32 1.5, %v547
      %v549 = vmul.f32 %v544, %v548
      %vm550 = vweird.f32 %v510
      %vm551 = vweird.f32 %v544
      %vm552 = vmor %vm550, %vm551
      %v553 = vsel %vm552, %v544, %v549
      %v554 = vrsqrt.pop %v511
      %v555 = vmul.f32 %v554, %v511
      %v556 = vmul.f32 %v555, %v554
      %v557 = vmul.f32 0.5, %v556
      %v558 = vsub.f32 1.5, %v557
      %v559 = vmul.f32 %v554, %v558
      %vm560 = vweird.f32 %v511
      %vm561 = vweird.f32 %v554
      %vm562 = vmor %vm560, %vm561
      %v563 = vsel %vm562, %v554, %v559
      %v564 = vrsqrt.pop %v512
      %v565 = vmul.f32 %v564, %v512
      %v566 = vmul.f32 %v565, %v564
      %v567 = vmul.f32 0.5, %v566
      %v568 = vsub.f32 1.5, %v567
      %v569 = vmul.f32 %v564, %v568
      %vm570 = vweird.f32 %v512
      %vm571 = vweird.f32 %v564
      %vm572 = vmor %vm570, %vm571
      %v573 = vsel %vm572, %v564, %v569
      %v574 = vrsqrt.pop %v513
      %v575 = vmul.f32 %v574, %v513
      %v576 = vmul.f32 %v575, %v574
      %v577 = vmul.f32 0.5, %v576
      %v578 = vsub.f32 1.5, %v577
      %v579 = vmul.f32 %v574, %v578
      %vm580 = vweird.f32 %v513
      %vm581 = vweird.f32 %v574
      %vm582 = vmor %vm580, %vm581
      %v583 = vsel %vm582, %v574, %v579
      %v584 = vrsqrt.pop %v514
      %v585 = vmul.f32 %v584, %v514
      %v586 = vmul.f32 %v585, %v584
      %v587 = vmul.f32 0.5, %v586
      %v588 = vsub.f32 1.5, %v587
      %v589 = vmul.f32 %v584, %v588
      %vm590 = vweird.f32 %v514
      %vm591 = vweird.f32 %v584
      %vm592 = vmor %vm590, %vm591
      %v593 = vsel %vm592, %v584, %v589
      %v594 = vrsqrt.pop %v515
      %v595 = vmul.f32 %v594, %v515
      %v596 = vmul.f32 %v595, %v594
      %v597 = vmul.f32 0.5, %v596
      %v598 = vsub.f32 1.5, %v597
      %v599 = vmul.f32 %v594, %v598
      %vm600 = vweird.f32 %v515
      %vm601 = vweird.f32 %v594
      %vm602 = vmor %vm600, %vm601
      %v603 = vsel %vm602, %v594, %v599
      %v604 = vrsqrt.pop %v516
      %v605 = vmul.f32 %v604, %v516
      %v606 = vmul.f32 %v605, %v604
      %v607 = vmul.f32 0.5, %v606
      %v608 = vsub.f32 1.5, %v607
      %v609 = vmul.f32 %v604, %v608
      %vm610 = vweird.f32 %v516
      %vm611 = vweird.f32 %v604
      %vm612 = vmor %vm610, %vm611
      %v613 = vsel %vm612, %v604, %v609
      %v614 = vrsqrt.pop %v517
      %v615 = vmul.f32 %v614, %v517
      %v616 = vmul.f32 %v615, %v614
      %v617 = vmul.f32 0.5, %v616
      %v618 = vsub.f32 1.5, %v617
      %v619 = vmul.f32 %v614, %v618
      %vm620 = vweird.f32 %v517
      %vm621 = vweird.f32 %v614
      %vm622 = vmor %vm620, %vm621
      %v623 = vsel %vm622, %v614, %v619
      %v624 = vrsqrt.pop %v518
      %v625 = vmul.f32 %v624, %v518
      %v626 = vmul.f32 %v625, %v624
      %v627 = vmul.f32 0.5, %v626
      %v628 = vsub.f32 1.5, %v627
      %v629 = vmul.f32 %v624, %v628
      %vm630 = vweird.f32 %v518
      %vm631 = vweird.f32 %v624
      %vm632 = vmor %vm630, %vm631
      %v633 = vsel %vm632, %v624, %v629
      %v634 = vrsqrt.pop %v519
      %v635 = vmul.f32 %v634, %v519
      %v636 = vmul.f32 %v635, %v634
      %v637 = vmul.f32 0.5, %v636
      %v638 = vsub.f32 1.5, %v637
      %v639 = vmul.f32 %v634, %v638
      %vm640 = vweird.f32 %v519
      %vm641 = vweird.f32 %v634
      %vm642 = vmor %vm640, %vm641
      %v643 = vsel %vm642, %v634, %v639
      %v644 = vrsqrt.pop %v520
      %v645 = vmul.f32 %v644, %v520
      %v646 = vmul.f32 %v645, %v644
      %v647 = vmul.f32 0.5, %v646
      %v648 = vsub.f32 1.5, %v647
      %v649 = vmul.f32 %v644, %v648
      %vm650 = vweird.f32 %v520
      %vm651 = vweird.f32 %v644
      %vm652 = vmor %vm650, %vm651
      %v653 = vsel %vm652, %v644, %v649
      %v654 = vrsqrt.pop %v521
      %v655 = vmul.f32 %v654, %v521
      %v656 = vmul.f32 %v655, %v654
      %v657 = vmul.f32 0.5, %v656
      %v658 = vsub.f32 1.5, %v657
      %v659 = vmul.f32 %v654, %v658
      %vm660 = vweird.f32 %v521
      %vm661 = vweird.f32 %v654
      %vm662 = vmor %vm660, %vm661
      %v663 = vsel %vm662, %v654, %v659
      %v664 = vrsqrt.pop %v522
      %v665 = vmul.f32 %v664, %v522
      %v666 = vmul.f32 %v665, %v664
      %v667 = vmul.f32 0.5, %v666
      %v668 = vsub.f32 1.5, %v667
      %v669 = vmul.f32 %v664, %v668
      %vm670 = vweird.f32 %v522
      %vm671 = vweird.f32 %v664
      %vm672 = vmor %vm670, %vm671
      %v673 = vsel %vm672, %v664, %v669
      %v674 = vrsqrt.pop %v523
      %v675 = vmul.f32 %v674, %v523
      %v676 = vmul.f32 %v675, %v674
      %v677 = vmul.f32 0.5, %v676
      %v678 = vsub.f32 1.5, %v677
      %v679 = vmul.f32 %v674, %v678
      %vm680 = vweird.f32 %v523
      %vm681 = vweird.f32 %v674
      %vm682 = vmor %vm680, %vm681
      %v683 = vsel %vm682, %v674, %v679
      %v684 = vmul.f32 %v283, %v283
      %v685 = vmul.f32 %v284, %v284
      %v686 = vmul.f32 %v285, %v285
      %v687 = vmul.f32 %v286, %v286
      %v688 = vmul.f32 %v287, %v287
      %v689 = vmul.f32 %v288, %v288
      %v690 = vmul.f32 %v289, %v289
      %v691 = vmul.f32 %v290, %v290
      %v692 = vmul.f32 %v291, %v291
      %v693 = vmul.f32 %v292, %v292
      %v694 = vmul.f32 %v293, %v293
      %v695 = vmul.f32 %v294, %v294
      %v696 = vmul.f32 %v295, %v295
      %v697 = vmul.f32 %v296, %v296
      %v698 = vmul.f32 %v297, %v297
      %v699 = vmul.f32 %v298, %v298
      %v700 = vsel %vm331, %v684, 0.0
      %701 = vadd.xlane.f32.xlu0 %v700
      %v702 = vpop.xlane.xlu0 %701
      %v703 = vsel %vm331, %v685, 0.0
      %704 = vadd.xlane.f32.xlu0 %v703
      %v705 = vpop.xlane.xlu0 %704
      %v706 = vsel %vm331, %v686, 0.0
      %707 = vadd.xlane.f32.xlu0 %v706
      %v708 = vpop.xlane.xlu0 %707
      %v709 = vsel %vm331, %v687, 0.0
      %710 = vadd.xlane.f32.xlu0 %v709
      %v711 = vpop.xlane.xlu0 %710
      %v712 = vsel %vm331, %v688, 0.0
      %713 = vadd.xlane.f32.xlu0 %v712
      %v714 = vpop.xlane.xlu0 %713
      %v715 = vsel %vm331, %v689, 0.0
      %716 = vadd.xlane.f32.xlu0 %v715
      %v717 = vpop.xlane.xlu0 %716
      %v718 = vsel %vm331, %v690, 0.0
      %719 = vadd.xlane.f32.xlu0 %v718
      %v720 = vpop.xlane.xlu0 %719
      %v721 = vsel %vm331, %v691, 0.0
      %722 = vadd.xlane.f32.xlu0 %v721
      %v723 = vpop.xlane.xlu0 %722
      %v724 = vsel %vm331, %v692, 0.0
      %725 = vadd.xlane.f32.xlu0 %v724
      %v726 = vpop.xlane.xlu0 %725
      %v727 = vsel %vm331, %v693, 0.0
      %728 = vadd.xlane.f32.xlu0 %v727
      %v729 = vpop.xlane.xlu0 %728
      %v730 = vsel %vm331, %v694, 0.0
      %731 = vadd.xlane.f32.xlu0 %v730
      %v732 = vpop.xlane.xlu0 %731
      %v733 = vsel %vm331, %v695, 0.0
      %734 = vadd.xlane.f32.xlu0 %v733
      %v735 = vpop.xlane.xlu0 %734
      %v736 = vsel %vm331, %v696, 0.0
      %737 = vadd.xlane.f32.xlu0 %v736
      %v738 = vpop.xlane.xlu0 %737
      %v739 = vsel %vm331, %v697, 0.0
      %740 = vadd.xlane.f32.xlu0 %v739
      %v741 = vpop.xlane.xlu0 %740
      %v742 = vsel %vm331, %v698, 0.0
      %743 = vadd.xlane.f32.xlu0 %v742
      %v744 = vpop.xlane.xlu0 %743
      %v745 = vsel %vm331, %v699, 0.0
      %746 = vadd.xlane.f32.xlu0 %v745
      %v747 = vpop.xlane.xlu0 %746
      %v748 = vmax.f32 %v702, 1e-16
      %v749 = vmax.f32 %v705, 1e-16
      %v750 = vmax.f32 %v708, 1e-16
      %v751 = vmax.f32 %v711, 1e-16
      %v752 = vmax.f32 %v714, 1e-16
      %v753 = vmax.f32 %v717, 1e-16
      %v754 = vmax.f32 %v720, 1e-16
      %v755 = vmax.f32 %v723, 1e-16
      %v756 = vmax.f32 %v726, 1e-16
      %v757 = vmax.f32 %v729, 1e-16
      %v758 = vmax.f32 %v732, 1e-16
      %v759 = vmax.f32 %v735, 1e-16
      %v760 = vmax.f32 %v738, 1e-16
      %v761 = vmax.f32 %v741, 1e-16
      %v762 = vmax.f32 %v744, 1e-16
      %v763 = vmax.f32 %v747, 1e-16
      %v764 = vrsqrt.pop %v748
      %v765 = vmul.f32 %v764, %v748
      %v766 = vmul.f32 %v765, %v764
      %v767 = vmul.f32 0.5, %v766
      %v768 = vsub.f32 1.5, %v767
      %v769 = vmul.f32 %v764, %v768
      %vm770 = vweird.f32 %v748
      %vm771 = vweird.f32 %v764
      %vm772 = vmor %vm770, %vm771
      %v773 = vsel %vm772, %v764, %v769
      %v774 = vrsqrt.pop %v749
      %v775 = vmul.f32 %v774, %v749
      %v776 = vmul.f32 %v775, %v774
      %v777 = vmul.f32 0.5, %v776
      %v778 = vsub.f32 1.5, %v777
      %v779 = vmul.f32 %v774, %v778
      %vm780 = vweird.f32 %v749
      %vm781 = vweird.f32 %v774
      %vm782 = vmor %vm780, %vm781
      %v783 = vsel %vm782, %v774, %v779
      %v784 = vrsqrt.pop %v750
      %v785 = vmul.f32 %v784, %v750
      %v786 = vmul.f32 %v785, %v784
      %v787 = vmul.f32 0.5, %v786
      %v788 = vsub.f32 1.5, %v787
      %v789 = vmul.f32 %v784, %v788
      %vm790 = vweird.f32 %v750
      %vm791 = vweird.f32 %v784
      %vm792 = vmor %vm790, %vm791
      %v793 = vsel %vm792, %v784, %v789
      %v794 = vrsqrt.pop %v751
      %v795 = vmul.f32 %v794, %v751
      %v796 = vmul.f32 %v795, %v794
      %v797 = vmul.f32 0.5, %v796
      %v798 = vsub.f32 1.5, %v797
      %v799 = vmul.f32 %v794, %v798
      %vm800 = vweird.f32 %v751
      %vm801 = vweird.f32 %v794
      %vm802 = vmor %vm800, %vm801
      %v803 = vsel %vm802, %v794, %v799
      %v804 = vrsqrt.pop %v752
      %v805 = vmul.f32 %v804, %v752
      %v806 = vmul.f32 %v805, %v804
      %v807 = vmul.f32 0.5, %v806
      %v808 = vsub.f32 1.5, %v807
      %v809 = vmul.f32 %v804, %v808
      %vm810 = vweird.f32 %v752
      %vm811 = vweird.f32 %v804
      %vm812 = vmor %vm810, %vm811
      %v813 = vsel %vm812, %v804, %v809
      %v814 = vrsqrt.pop %v753
      %v815 = vmul.f32 %v814, %v753
      %v816 = vmul.f32 %v815, %v814
      %v817 = vmul.f32 0.5, %v816
      %v818 = vsub.f32 1.5, %v817
      %v819 = vmul.f32 %v814, %v818
      %vm820 = vweird.f32 %v753
      %vm821 = vweird.f32 %v814
      %vm822 = vmor %vm820, %vm821
      %v823 = vsel %vm822, %v814, %v819
      %v824 = vrsqrt.pop %v754
      %v825 = vmul.f32 %v824, %v754
      %v826 = vmul.f32 %v825, %v824
      %v827 = vmul.f32 0.5, %v826
      %v828 = vsub.f32 1.5, %v827
      %v829 = vmul.f32 %v824, %v828
      %vm830 = vweird.f32 %v754
      %vm831 = vweird.f32 %v824
      %vm832 = vmor %vm830, %vm831
      %v833 = vsel %vm832, %v824, %v829
      %v834 = vrsqrt.pop %v755
      %v835 = vmul.f32 %v834, %v755
      %v836 = vmul.f32 %v835, %v834
      %v837 = vmul.f32 0.5, %v836
      %v838 = vsub.f32 1.5, %v837
      %v839 = vmul.f32 %v834, %v838
      %vm840 = vweird.f32 %v755
      %vm841 = vweird.f32 %v834
      %vm842 = vmor %vm840, %vm841
      %v843 = vsel %vm842, %v834, %v839
      %v844 = vrsqrt.pop %v756
      %v845 = vmul.f32 %v844, %v756
      %v846 = vmul.f32 %v845, %v844
      %v847 = vmul.f32 0.5, %v846
      %v848 = vsub.f32 1.5, %v847
      %v849 = vmul.f32 %v844, %v848
      %vm850 = vweird.f32 %v756
      %vm851 = vweird.f32 %v844
      %vm852 = vmor %vm850, %vm851
      %v853 = vsel %vm852, %v844, %v849
      %v854 = vrsqrt.pop %v757
      %v855 = vmul.f32 %v854, %v757
      %v856 = vmul.f32 %v855, %v854
      %v857 = vmul.f32 0.5, %v856
      %v858 = vsub.f32 1.5, %v857
      %v859 = vmul.f32 %v854, %v858
      %vm860 = vweird.f32 %v757
      %vm861 = vweird.f32 %v854
      %vm862 = vmor %vm860, %vm861
      %v863 = vsel %vm862, %v854, %v859
      %v864 = vrsqrt.pop %v758
      %v865 = vmul.f32 %v864, %v758
      %v866 = vmul.f32 %v865, %v864
      %v867 = vmul.f32 0.5, %v866
      %v868 = vsub.f32 1.5, %v867
      %v869 = vmul.f32 %v864, %v868
      %vm870 = vweird.f32 %v758
      %vm871 = vweird.f32 %v864
      %vm872 = vmor %vm870, %vm871
      %v873 = vsel %vm872, %v864, %v869
      %v874 = vrsqrt.pop %v759
      %v875 = vmul.f32 %v874, %v759
      %v876 = vmul.f32 %v875, %v874
      %v877 = vmul.f32 0.5, %v876
      %v878 = vsub.f32 1.5, %v877
      %v879 = vmul.f32 %v874, %v878
      %vm880 = vweird.f32 %v759
      %vm881 = vweird.f32 %v874
      %vm882 = vmor %vm880, %vm881
      %v883 = vsel %vm882, %v874, %v879
      %v884 = vrsqrt.pop %v760
      %v885 = vmul.f32 %v884, %v760
      %v886 = vmul.f32 %v885, %v884
      %v887 = vmul.f32 0.5, %v886
      %v888 = vsub.f32 1.5, %v887
      %v889 = vmul.f32 %v884, %v888
      %vm890 = vweird.f32 %v760
      %vm891 = vweird.f32 %v884
      %vm892 = vmor %vm890, %vm891
      %v893 = vsel %vm892, %v884, %v889
      %v894 = vrsqrt.pop %v761
      %v895 = vmul.f32 %v894, %v761
      %v896 = vmul.f32 %v895, %v894
      %v897 = vmul.f32 0.5, %v896
      %v898 = vsub.f32 1.5, %v897
      %v899 = vmul.f32 %v894, %v898
      %vm900 = vweird.f32 %v761
      %vm901 = vweird.f32 %v894
      %vm902 = vmor %vm900, %vm901
      %v903 = vsel %vm902, %v894, %v899
      %v904 = vrsqrt.pop %v762
      %v905 = vmul.f32 %v904, %v762
      %v906 = vmul.f32 %v905, %v904
      %v907 = vmul.f32 0.5, %v906
      %v908 = vsub.f32 1.5, %v907
      %v909 = vmul.f32 %v904, %v908
      %vm910 = vweird.f32 %v762
      %vm911 = vweird.f32 %v904
      %vm912 = vmor %vm910, %vm911
      %v913 = vsel %vm912, %v904, %v909
      %v914 = vrsqrt.pop %v763
      %v915 = vmul.f32 %v914, %v763
      %v916 = vmul.f32 %v915, %v914
      %v917 = vmul.f32 0.5, %v916
      %v918 = vsub.f32 1.5, %v917
      %v919 = vmul.f32 %v914, %v918
      %vm920 = vweird.f32 %v763
      %vm921 = vweird.f32 %v914
      %vm922 = vmor %vm920, %vm921
      %v923 = vsel %vm922, %v914, %v919
      %v924 = vmul.f32 %v299, %v299
      %v925 = vmul.f32 %v300, %v300
      %v926 = vmul.f32 %v301, %v301
      %v927 = vmul.f32 %v302, %v302
      %v928 = vmul.f32 %v303, %v303
      %v929 = vmul.f32 %v304, %v304
      %v930 = vmul.f32 %v305, %v305
      %v931 = vmul.f32 %v306, %v306
      %v932 = vmul.f32 %v307, %v307
      %v933 = vmul.f32 %v308, %v308
      %v934 = vmul.f32 %v309, %v309
      %v935 = vmul.f32 %v310, %v310
      %v936 = vmul.f32 %v311, %v311
      %v937 = vmul.f32 %v312, %v312
      %v938 = vmul.f32 %v313, %v313
      %v939 = vmul.f32 %v314, %v314
      %v940 = vsel %vm331, %v924, 0.0
      %941 = vadd.xlane.f32.xlu0 %v940
      %v942 = vpop.xlane.xlu0 %941
      %v943 = vsel %vm331, %v925, 0.0
      %944 = vadd.xlane.f32.xlu0 %v943
      %v945 = vpop.xlane.xlu0 %944
      %v946 = vsel %vm331, %v926, 0.0
      %947 = vadd.xlane.f32.xlu0 %v946
      %v948 = vpop.xlane.xlu0 %947
      %v949 = vsel %vm331, %v927, 0.0
      %950 = vadd.xlane.f32.xlu0 %v949
      %v951 = vpop.xlane.xlu0 %950
      %v952 = vsel %vm331, %v928, 0.0
      %953 = vadd.xlane.f32.xlu0 %v952
      %v954 = vpop.xlane.xlu0 %953
      %v955 = vsel %vm331, %v929, 0.0
      %956 = vadd.xlane.f32.xlu0 %v955
      %v957 = vpop.xlane.xlu0 %956
      %v958 = vsel %vm331, %v930, 0.0
      %959 = vadd.xlane.f32.xlu0 %v958
      %v960 = vpop.xlane.xlu0 %959
      %v961 = vsel %vm331, %v931, 0.0
      %962 = vadd.xlane.f32.xlu0 %v961
      %v963 = vpop.xlane.xlu0 %962
      %v964 = vsel %vm331, %v932, 0.0
      %965 = vadd.xlane.f32.xlu0 %v964
      %v966 = vpop.xlane.xlu0 %965
      %v967 = vsel %vm331, %v933, 0.0
      %968 = vadd.xlane.f32.xlu0 %v967
      %v969 = vpop.xlane.xlu0 %968
      %v970 = vsel %vm331, %v934, 0.0
      %971 = vadd.xlane.f32.xlu0 %v970
      %v972 = vpop.xlane.xlu0 %971
      %v973 = vsel %vm331, %v935, 0.0
      %974 = vadd.xlane.f32.xlu0 %v973
      %v975 = vpop.xlane.xlu0 %974
      %v976 = vsel %vm331, %v936, 0.0
      %977 = vadd.xlane.f32.xlu0 %v976
      %v978 = vpop.xlane.xlu0 %977
      %v979 = vsel %vm331, %v937, 0.0
      %980 = vadd.xlane.f32.xlu0 %v979
      %v981 = vpop.xlane.xlu0 %980
      %v982 = vsel %vm331, %v938, 0.0
      %983 = vadd.xlane.f32.xlu0 %v982
      %v984 = vpop.xlane.xlu0 %983
      %v985 = vsel %vm331, %v939, 0.0
      %986 = vadd.xlane.f32.xlu0 %v985
      %v987 = vpop.xlane.xlu0 %986
      %v988 = vmax.f32 %v942, 1e-16
      %v989 = vmax.f32 %v945, 1e-16
      %v990 = vmax.f32 %v948, 1e-16
      %v991 = vmax.f32 %v951, 1e-16
      %v992 = vmax.f32 %v954, 1e-16
      %v993 = vmax.f32 %v957, 1e-16
      %v994 = vmax.f32 %v960, 1e-16
      %v995 = vmax.f32 %v963, 1e-16
      %v996 = vmax.f32 %v966, 1e-16
      %v997 = vmax.f32 %v969, 1e-16
      %v998 = vmax.f32 %v972, 1e-16
      %v999 = vmax.f32 %v975, 1e-16
      %v1000 = vmax.f32 %v978, 1e-16
      %v1001 = vmax.f32 %v981, 1e-16
      %v1002 = vmax.f32 %v984, 1e-16
      %v1003 = vmax.f32 %v987, 1e-16
      %v1004 = vrsqrt.pop %v988
      %v1005 = vmul.f32 %v1004, %v988
      %v1006 = vmul.f32 %v1005, %v1004
      %v1007 = vmul.f32 0.5, %v1006
      %v1008 = vsub.f32 1.5, %v1007
      %v1009 = vmul.f32 %v1004, %v1008
      %vm1010 = vweird.f32 %v988
      %vm1011 = vweird.f32 %v1004
      %vm1012 = vmor %vm1010, %vm1011
      %v1013 = vsel %vm1012, %v1004, %v1009
      %v1014 = vrsqrt.pop %v989
      %v1015 = vmul.f32 %v1014, %v989
      %v1016 = vmul.f32 %v1015, %v1014
      %v1017 = vmul.f32 0.5, %v1016
      %v1018 = vsub.f32 1.5, %v1017
      %v1019 = vmul.f32 %v1014, %v1018
      %vm1020 = vweird.f32 %v989
      %vm1021 = vweird.f32 %v1014
      %vm1022 = vmor %vm1020, %vm1021
      %v1023 = vsel %vm1022, %v1014, %v1019
      %v1024 = vrsqrt.pop %v990
      %v1025 = vmul.f32 %v1024, %v990
      %v1026 = vmul.f32 %v1025, %v1024
      %v1027 = vmul.f32 0.5, %v1026
      %v1028 = vsub.f32 1.5, %v1027
      %v1029 = vmul.f32 %v1024, %v1028
      %vm1030 = vweird.f32 %v990
      %vm1031 = vweird.f32 %v1024
      %vm1032 = vmor %vm1030, %vm1031
      %v1033 = vsel %vm1032, %v1024, %v1029
      %v1034 = vrsqrt.pop %v991
      %v1035 = vmul.f32 %v1034, %v991
      %v1036 = vmul.f32 %v1035, %v1034
      %v1037 = vmul.f32 0.5, %v1036
      %v1038 = vsub.f32 1.5, %v1037
      %v1039 = vmul.f32 %v1034, %v1038
      %vm1040 = vweird.f32 %v991
      %vm1041 = vweird.f32 %v1034
      %vm1042 = vmor %vm1040, %vm1041
      %v1043 = vsel %vm1042, %v1034, %v1039
      %v1044 = vrsqrt.pop %v992
      %v1045 = vmul.f32 %v1044, %v992
      %v1046 = vmul.f32 %v1045, %v1044
      %v1047 = vmul.f32 0.5, %v1046
      %v1048 = vsub.f32 1.5, %v1047
      %v1049 = vmul.f32 %v1044, %v1048
      %vm1050 = vweird.f32 %v992
      %vm1051 = vweird.f32 %v1044
      %vm1052 = vmor %vm1050, %vm1051
      %v1053 = vsel %vm1052, %v1044, %v1049
      %v1054 = vrsqrt.pop %v993
      %v1055 = vmul.f32 %v1054, %v993
      %v1056 = vmul.f32 %v1055, %v1054
      %v1057 = vmul.f32 0.5, %v1056
      %v1058 = vsub.f32 1.5, %v1057
      %v1059 = vmul.f32 %v1054, %v1058
      %vm1060 = vweird.f32 %v993
      %vm1061 = vweird.f32 %v1054
      %vm1062 = vmor %vm1060, %vm1061
      %v1063 = vsel %vm1062, %v1054, %v1059
      %v1064 = vrsqrt.pop %v994
      %v1065 = vmul.f32 %v1064, %v994
      %v1066 = vmul.f32 %v1065, %v1064
      %v1067 = vmul.f32 0.5, %v1066
      %v1068 = vsub.f32 1.5, %v1067
      %v1069 = vmul.f32 %v1064, %v1068
      %vm1070 = vweird.f32 %v994
      %vm1071 = vweird.f32 %v1064
      %vm1072 = vmor %vm1070, %vm1071
      %v1073 = vsel %vm1072, %v1064, %v1069
      %v1074 = vrsqrt.pop %v995
      %v1075 = vmul.f32 %v1074, %v995
      %v1076 = vmul.f32 %v1075, %v1074
      %v1077 = vmul.f32 0.5, %v1076
      %v1078 = vsub.f32 1.5, %v1077
      %v1079 = vmul.f32 %v1074, %v1078
      %vm1080 = vweird.f32 %v995
      %vm1081 = vweird.f32 %v1074
      %vm1082 = vmor %vm1080, %vm1081
      %v1083 = vsel %vm1082, %v1074, %v1079
      %v1084 = vrsqrt.pop %v996
      %v1085 = vmul.f32 %v1084, %v996
      %v1086 = vmul.f32 %v1085, %v1084
      %v1087 = vmul.f32 0.5, %v1086
      %v1088 = vsub.f32 1.5, %v1087
      %v1089 = vmul.f32 %v1084, %v1088
      %vm1090 = vweird.f32 %v996
      %vm1091 = vweird.f32 %v1084
      %vm1092 = vmor %vm1090, %vm1091
      %v1093 = vsel %vm1092, %v1084, %v1089
      %v1094 = vrsqrt.pop %v997
      %v1095 = vmul.f32 %v1094, %v997
      %v1096 = vmul.f32 %v1095, %v1094
      %v1097 = vmul.f32 0.5, %v1096
      %v1098 = vsub.f32 1.5, %v1097
      %v1099 = vmul.f32 %v1094, %v1098
      %vm1100 = vweird.f32 %v997
      %vm1101 = vweird.f32 %v1094
      %vm1102 = vmor %vm1100, %vm1101
      %v1103 = vsel %vm1102, %v1094, %v1099
      %v1104 = vrsqrt.pop %v998
      %v1105 = vmul.f32 %v1104, %v998
      %v1106 = vmul.f32 %v1105, %v1104
      %v1107 = vmul.f32 0.5, %v1106
      %v1108 = vsub.f32 1.5, %v1107
      %v1109 = vmul.f32 %v1104, %v1108
      %vm1110 = vweird.f32 %v998
      %vm1111 = vweird.f32 %v1104
      %vm1112 = vmor %vm1110, %vm1111
      %v1113 = vsel %vm1112, %v1104, %v1109
      %v1114 = vrsqrt.pop %v999
      %v1115 = vmul.f32 %v1114, %v999
      %v1116 = vmul.f32 %v1115, %v1114
      %v1117 = vmul.f32 0.5, %v1116
      %v1118 = vsub.f32 1.5, %v1117
      %v1119 = vmul.f32 %v1114, %v1118
      %vm1120 = vweird.f32 %v999
      %vm1121 = vweird.f32 %v1114
      %vm1122 = vmor %vm1120, %vm1121
      %v1123 = vsel %vm1122, %v1114, %v1119
      %v1124 = vrsqrt.pop %v1000
      %v1125 = vmul.f32 %v1124, %v1000
      %v1126 = vmul.f32 %v1125, %v1124
      %v1127 = vmul.f32 0.5, %v1126
      %v1128 = vsub.f32 1.5, %v1127
      %v1129 = vmul.f32 %v1124, %v1128
      %vm1130 = vweird.f32 %v1000
      %vm1131 = vweird.f32 %v1124
      %vm1132 = vmor %vm1130, %vm1131
      %v1133 = vsel %vm1132, %v1124, %v1129
      %v1134 = vrsqrt.pop %v1001
      %v1135 = vmul.f32 %v1134, %v1001
      %v1136 = vmul.f32 %v1135, %v1134
      %v1137 = vmul.f32 0.5, %v1136
      %v1138 = vsub.f32 1.5, %v1137
      %v1139 = vmul.f32 %v1134, %v1138
      %vm1140 = vweird.f32 %v1001
      %vm1141 = vweird.f32 %v1134
      %vm1142 = vmor %vm1140, %vm1141
      %v1143 = vsel %vm1142, %v1134, %v1139
      %v1144 = vrsqrt.pop %v1002
      %v1145 = vmul.f32 %v1144, %v1002
      %v1146 = vmul.f32 %v1145, %v1144
      %v1147 = vmul.f32 0.5, %v1146
      %v1148 = vsub.f32 1.5, %v1147
      %v1149 = vmul.f32 %v1144, %v1148
      %vm1150 = vweird.f32 %v1002
      %vm1151 = vweird.f32 %v1144
      %vm1152 = vmor %vm1150, %vm1151
      %v1153 = vsel %vm1152, %v1144, %v1149
      %v1154 = vrsqrt.pop %v1003
      %v1155 = vmul.f32 %v1154, %v1003
      %v1156 = vmul.f32 %v1155, %v1154
      %v1157 = vmul.f32 0.5, %v1156
      %v1158 = vsub.f32 1.5, %v1157
      %v1159 = vmul.f32 %v1154, %v1158
      %vm1160 = vweird.f32 %v1003
      %vm1161 = vweird.f32 %v1154
      %vm1162 = vmor %vm1160, %vm1161
      %v1163 = vsel %vm1162, %v1154, %v1159
      %v1164 = vmul.f32 %v334, %v533
      %v1165 = vmul.f32 %v337, %v543
      %v1166 = vmul.f32 %v340, %v553
      %v1167 = vmul.f32 %v343, %v563
      %v1168 = vmul.f32 %v346, %v573
      %v1169 = vmul.f32 %v349, %v583
      %v1170 = vmul.f32 %v352, %v593
      %v1171 = vmul.f32 %v355, %v603
      %v1172 = vmul.f32 %v358, %v613
      %v1173 = vmul.f32 %v361, %v623
      %v1174 = vmul.f32 %v364, %v633
      %v1175 = vmul.f32 %v367, %v643
      %v1176 = vmul.f32 %v370, %v653
      %v1177 = vmul.f32 %v373, %v663
      %v1178 = vmul.f32 %v376, %v673
      %v1179 = vmul.f32 %v379, %v683
      %v1180 = vmul.f32 %v1164, %v773
      %v1181 = vmul.f32 %v1165, %v783
      %v1182 = vmul.f32 %v1166, %v793
      %v1183 = vmul.f32 %v1167, %v803
      %v1184 = vmul.f32 %v1168, %v813
      %v1185 = vmul.f32 %v1169, %v823
      %v1186 = vmul.f32 %v1170, %v833
      %v1187 = vmul.f32 %v1171, %v843
      %v1188 = vmul.f32 %v1172, %v853
      %v1189 = vmul.f32 %v1173, %v863
      %v1190 = vmul.f32 %v1174, %v873
      %v1191 = vmul.f32 %v1175, %v883
      %v1192 = vmul.f32 %v1176, %v893
      %v1193 = vmul.f32 %v1177, %v903
      %v1194 = vmul.f32 %v1178, %v913
      %v1195 = vmul.f32 %v1179, %v923
      %v1196 = vmul.f32 %v398, %v533
      %v1197 = vmul.f32 %v401, %v543
      %v1198 = vmul.f32 %v404, %v553
      %v1199 = vmul.f32 %v407, %v563
      %v1200 = vmul.f32 %v410, %v573
      %v1201 = vmul.f32 %v413, %v583
      %v1202 = vmul.f32 %v416, %v593
      %v1203 = vmul.f32 %v419, %v603
      %v1204 = vmul.f32 %v422, %v613
      %v1205 = vmul.f32 %v425, %v623
      %v1206 = vmul.f32 %v428, %v633
      %v1207 = vmul.f32 %v431, %v643
      %v1208 = vmul.f32 %v434, %v653
      %v1209 = vmul.f32 %v437, %v663
      %v1210 = vmul.f32 %v440, %v673
      %v1211 = vmul.f32 %v443, %v683
      %v1212 = vmul.f32 %v1196, %v1013
      %v1213 = vmul.f32 %v1197, %v1023
      %v1214 = vmul.f32 %v1198, %v1033
      %v1215 = vmul.f32 %v1199, %v1043
      %v1216 = vmul.f32 %v1200, %v1053
      %v1217 = vmul.f32 %v1201, %v1063
      %v1218 = vmul.f32 %v1202, %v1073
      %v1219 = vmul.f32 %v1203, %v1083
      %v1220 = vmul.f32 %v1204, %v1093
      %v1221 = vmul.f32 %v1205, %v1103
      %v1222 = vmul.f32 %v1206, %v1113
      %v1223 = vmul.f32 %v1207, %v1123
      %v1224 = vmul.f32 %v1208, %v1133
      %v1225 = vmul.f32 %v1209, %v1143
      %v1226 = vmul.f32 %v1210, %v1153
      %v1227 = vmul.f32 %v1211, %v1163
      %v1228 = vld [vmem:[%s259] sm:$0xff]
      %v1229 = vld [vmem:[%s259 + $0x8] sm:$0xff]
      %v1230 = vld [vmem:[%s259 + $0x10] sm:$0xff]
      %v1231 = vld [vmem:[%s259 + $0x18] sm:$0xff]
      %v1232 = vld [vmem:[%s259 + $0x20] sm:$0xff]
      %v1233 = vld [vmem:[%s259 + $0x28] sm:$0xff]
      %v1234 = vld [vmem:[%s259 + $0x30] sm:$0xff]
      %v1235 = vld [vmem:[%s259 + $0x38] sm:$0xff]
      %v1236 = vld [vmem:[%s259 + $0x40] sm:$0xff]
      %v1237 = vld [vmem:[%s259 + $0x48] sm:$0xff]
      %v1238 = vld [vmem:[%s259 + $0x50] sm:$0xff]
      %v1239 = vld [vmem:[%s259 + $0x58] sm:$0xff]
      %v1240 = vld [vmem:[%s259 + $0x60] sm:$0xff]
      %v1241 = vld [vmem:[%s259 + $0x68] sm:$0xff]
      %v1242 = vld [vmem:[%s259 + $0x70] sm:$0xff]
      %v1243 = vld [vmem:[%s259 + $0x78] sm:$0xff]
      %v1244 = vsub.f32 1.25, %v1180
      %v1245 = vsub.f32 1.25, %v1181
      %v1246 = vsub.f32 1.25, %v1182
      %v1247 = vsub.f32 1.25, %v1183
      %v1248 = vsub.f32 1.25, %v1184
      %v1249 = vsub.f32 1.25, %v1185
      %v1250 = vsub.f32 1.25, %v1186
      %v1251 = vsub.f32 1.25, %v1187
      %v1252 = vsub.f32 1.25, %v1188
      %v1253 = vsub.f32 1.25, %v1189
      %v1254 = vsub.f32 1.25, %v1190
      %v1255 = vsub.f32 1.25, %v1191
      %v1256 = vsub.f32 1.25, %v1192
      %v1257 = vsub.f32 1.25, %v1193
      %v1258 = vsub.f32 1.25, %v1194
      %v1259 = vsub.f32 1.25, %v1195
      %v1260 = vmax.f32 %v1244, 0.0
      %v1261 = vmax.f32 %v1245, 0.0
      %v1262 = vmax.f32 %v1246, 0.0
      %v1263 = vmax.f32 %v1247, 0.0
      %v1264 = vmax.f32 %v1248, 0.0
      %v1265 = vmax.f32 %v1249, 0.0
      %v1266 = vmax.f32 %v1250, 0.0
      %v1267 = vmax.f32 %v1251, 0.0
      %v1268 = vmax.f32 %v1252, 0.0
      %v1269 = vmax.f32 %v1253, 0.0
      %v1270 = vmax.f32 %v1254, 0.0
      %v1271 = vmax.f32 %v1255, 0.0
      %v1272 = vmax.f32 %v1256, 0.0
      %v1273 = vmax.f32 %v1257, 0.0
      %v1274 = vmax.f32 %v1258, 0.0
      %v1275 = vmax.f32 %v1259, 0.0
      %v1276 = vmul.f32 %v1260, %v1228
      %v1277 = vmul.f32 %v1261, %v1229
      %v1278 = vmul.f32 %v1262, %v1230
      %v1279 = vmul.f32 %v1263, %v1231
      %v1280 = vmul.f32 %v1264, %v1232
      %v1281 = vmul.f32 %v1265, %v1233
      %v1282 = vmul.f32 %v1266, %v1234
      %v1283 = vmul.f32 %v1267, %v1235
      %v1284 = vmul.f32 %v1268, %v1236
      %v1285 = vmul.f32 %v1269, %v1237
      %v1286 = vmul.f32 %v1270, %v1238
      %v1287 = vmul.f32 %v1271, %v1239
      %v1288 = vmul.f32 %v1272, %v1240
      %v1289 = vmul.f32 %v1273, %v1241
      %v1290 = vmul.f32 %v1274, %v1242
      %v1291 = vmul.f32 %v1275, %v1243
      %v1292 = vadd.f32 %v1212, 0.25
      %v1293 = vadd.f32 %v1213, 0.25
      %v1294 = vadd.f32 %v1214, 0.25
      %v1295 = vadd.f32 %v1215, 0.25
      %v1296 = vadd.f32 %v1216, 0.25
      %v1297 = vadd.f32 %v1217, 0.25
      %v1298 = vadd.f32 %v1218, 0.25
      %v1299 = vadd.f32 %v1219, 0.25
      %v1300 = vadd.f32 %v1220, 0.25
      %v1301 = vadd.f32 %v1221, 0.25
      %v1302 = vadd.f32 %v1222, 0.25
      %v1303 = vadd.f32 %v1223, 0.25
      %v1304 = vadd.f32 %v1224, 0.25
      %v1305 = vadd.f32 %v1225, 0.25
      %v1306 = vadd.f32 %v1226, 0.25
      %v1307 = vadd.f32 %v1227, 0.25
      %v1308 = vmax.f32 %v1292, 0.0
      %v1309 = vmax.f32 %v1293, 0.0
      %v1310 = vmax.f32 %v1294, 0.0
      %v1311 = vmax.f32 %v1295, 0.0
      %v1312 = vmax.f32 %v1296, 0.0
      %v1313 = vmax.f32 %v1297, 0.0
      %v1314 = vmax.f32 %v1298, 0.0
      %v1315 = vmax.f32 %v1299, 0.0
      %v1316 = vmax.f32 %v1300, 0.0
      %v1317 = vmax.f32 %v1301, 0.0
      %v1318 = vmax.f32 %v1302, 0.0
      %v1319 = vmax.f32 %v1303, 0.0
      %v1320 = vmax.f32 %v1304, 0.0
      %v1321 = vmax.f32 %v1305, 0.0
      %v1322 = vmax.f32 %v1306, 0.0
      %v1323 = vmax.f32 %v1307, 0.0
      %v1324 = vmul.f32 %v1308, %v1228
      %v1325 = vmul.f32 %v1309, %v1229
      %v1326 = vmul.f32 %v1310, %v1230
      %v1327 = vmul.f32 %v1311, %v1231
      %v1328 = vmul.f32 %v1312, %v1232
      %v1329 = vmul.f32 %v1313, %v1233
      %v1330 = vmul.f32 %v1314, %v1234
      %v1331 = vmul.f32 %v1315, %v1235
      %v1332 = vmul.f32 %v1316, %v1236
      %v1333 = vmul.f32 %v1317, %v1237
      %v1334 = vmul.f32 %v1318, %v1238
      %v1335 = vmul.f32 %v1319, %v1239
      %v1336 = vmul.f32 %v1320, %v1240
      %v1337 = vmul.f32 %v1321, %v1241
      %v1338 = vmul.f32 %v1322, %v1242
      %v1339 = vmul.f32 %v1323, %v1243
      %v1340 = vmul.f32 %v1276, -16.0
      %v1341 = vmul.f32 %v1277, -16.0
      %v1342 = vmul.f32 %v1278, -16.0
      %v1343 = vmul.f32 %v1279, -16.0
      %v1344 = vmul.f32 %v1280, -16.0
      %v1345 = vmul.f32 %v1281, -16.0
      %v1346 = vmul.f32 %v1282, -16.0
      %v1347 = vmul.f32 %v1283, -16.0
      %v1348 = vmul.f32 %v1284, -16.0
      %v1349 = vmul.f32 %v1285, -16.0
      %v1350 = vmul.f32 %v1286, -16.0
      %v1351 = vmul.f32 %v1287, -16.0
      %v1352 = vmul.f32 %v1288, -16.0
      %v1353 = vmul.f32 %v1289, -16.0
      %v1354 = vmul.f32 %v1290, -16.0
      %v1355 = vmul.f32 %v1291, -16.0
      %v1356 = vsub.f32 %v1180, 0.75
      %v1357 = vsub.f32 %v1181, 0.75
      %v1358 = vsub.f32 %v1182, 0.75
      %v1359 = vsub.f32 %v1183, 0.75
      %v1360 = vsub.f32 %v1184, 0.75
      %v1361 = vsub.f32 %v1185, 0.75
      %v1362 = vsub.f32 %v1186, 0.75
      %v1363 = vsub.f32 %v1187, 0.75
      %v1364 = vsub.f32 %v1188, 0.75
      %v1365 = vsub.f32 %v1189, 0.75
      %v1366 = vsub.f32 %v1190, 0.75
      %v1367 = vsub.f32 %v1191, 0.75
      %v1368 = vsub.f32 %v1192, 0.75
      %v1369 = vsub.f32 %v1193, 0.75
      %v1370 = vsub.f32 %v1194, 0.75
      %v1371 = vsub.f32 %v1195, 0.75
      %v1372 = vmul.f32 %v1340, %v1356
      %v1373 = vmul.f32 %v1341, %v1357
      %v1374 = vmul.f32 %v1342, %v1358
      %v1375 = vmul.f32 %v1343, %v1359
      %v1376 = vmul.f32 %v1344, %v1360
      %v1377 = vmul.f32 %v1345, %v1361
      %v1378 = vmul.f32 %v1346, %v1362
      %v1379 = vmul.f32 %v1347, %v1363
      %v1380 = vmul.f32 %v1348, %v1364
      %v1381 = vmul.f32 %v1349, %v1365
      %v1382 = vmul.f32 %v1350, %v1366
      %v1383 = vmul.f32 %v1351, %v1367
      %v1384 = vmul.f32 %v1352, %v1368
      %v1385 = vmul.f32 %v1353, %v1369
      %v1386 = vmul.f32 %v1354, %v1370
      %v1387 = vmul.f32 %v1355, %v1371
      %v1388 = vmul.f32 %v1324, 16.0
      %v1389 = vmul.f32 %v1325, 16.0
      %v1390 = vmul.f32 %v1326, 16.0
      %v1391 = vmul.f32 %v1327, 16.0
      %v1392 = vmul.f32 %v1328, 16.0
      %v1393 = vmul.f32 %v1329, 16.0
      %v1394 = vmul.f32 %v1330, 16.0
      %v1395 = vmul.f32 %v1331, 16.0
      %v1396 = vmul.f32 %v1332, 16.0
      %v1397 = vmul.f32 %v1333, 16.0
      %v1398 = vmul.f32 %v1334, 16.0
      %v1399 = vmul.f32 %v1335, 16.0
      %v1400 = vmul.f32 %v1336, 16.0
      %v1401 = vmul.f32 %v1337, 16.0
      %v1402 = vmul.f32 %v1338, 16.0
      %v1403 = vmul.f32 %v1339, 16.0
      %v1404 = vsub.f32 %v1212, 0.25
      %v1405 = vsub.f32 %v1213, 0.25
      %v1406 = vsub.f32 %v1214, 0.25
      %v1407 = vsub.f32 %v1215, 0.25
      %v1408 = vsub.f32 %v1216, 0.25
      %v1409 = vsub.f32 %v1217, 0.25
      %v1410 = vsub.f32 %v1218, 0.25
      %v1411 = vsub.f32 %v1219, 0.25
      %v1412 = vsub.f32 %v1220, 0.25
      %v1413 = vsub.f32 %v1221, 0.25
      %v1414 = vsub.f32 %v1222, 0.25
      %v1415 = vsub.f32 %v1223, 0.25
      %v1416 = vsub.f32 %v1224, 0.25
      %v1417 = vsub.f32 %v1225, 0.25
      %v1418 = vsub.f32 %v1226, 0.25
      %v1419 = vsub.f32 %v1227, 0.25
      %v1420 = vmul.f32 %v1388, %v1404
      %v1421 = vmul.f32 %v1389, %v1405
      %v1422 = vmul.f32 %v1390, %v1406
      %v1423 = vmul.f32 %v1391, %v1407
      %v1424 = vmul.f32 %v1392, %v1408
      %v1425 = vmul.f32 %v1393, %v1409
      %v1426 = vmul.f32 %v1394, %v1410
      %v1427 = vmul.f32 %v1395, %v1411
      %v1428 = vmul.f32 %v1396, %v1412
      %v1429 = vmul.f32 %v1397, %v1413
      %v1430 = vmul.f32 %v1398, %v1414
      %v1431 = vmul.f32 %v1399, %v1415
      %v1432 = vmul.f32 %v1400, %v1416
      %v1433 = vmul.f32 %v1401, %v1417
      %v1434 = vmul.f32 %v1402, %v1418
      %v1435 = vmul.f32 %v1403, %v1419
      %1452 = vrot.lane.b32.xlu0 %v1372, 1
      %v1453 = vpop.permute.xlu0 %1452
      %1454 = vrot.lane.b32.xlu0 %v1373, 1
      %v1455 = vpop.permute.xlu0 %1454
      %1456 = vrot.lane.b32.xlu0 %v1374, 1
      %v1457 = vpop.permute.xlu0 %1456
      %1458 = vrot.lane.b32.xlu0 %v1375, 1
      %v1459 = vpop.permute.xlu0 %1458
      %1460 = vrot.lane.b32.xlu0 %v1376, 1
      %v1461 = vpop.permute.xlu0 %1460
      %1462 = vrot.lane.b32.xlu0 %v1377, 1
      %v1463 = vpop.permute.xlu0 %1462
      %1464 = vrot.lane.b32.xlu0 %v1378, 1
      %v1465 = vpop.permute.xlu0 %1464
      %1466 = vrot.lane.b32.xlu0 %v1379, 1
      %v1467 = vpop.permute.xlu0 %1466
      %1468 = vrot.lane.b32.xlu0 %v1380, 1
      %v1469 = vpop.permute.xlu0 %1468
      %1470 = vrot.lane.b32.xlu0 %v1381, 1
      %v1471 = vpop.permute.xlu0 %1470
      %1472 = vrot.lane.b32.xlu0 %v1382, 1
      %v1473 = vpop.permute.xlu0 %1472
      %1474 = vrot.lane.b32.xlu0 %v1383, 1
      %v1475 = vpop.permute.xlu0 %1474
      %1476 = vrot.lane.b32.xlu0 %v1384, 1
      %v1477 = vpop.permute.xlu0 %1476
      %1478 = vrot.lane.b32.xlu0 %v1385, 1
      %v1479 = vpop.permute.xlu0 %1478
      %1480 = vrot.lane.b32.xlu0 %v1386, 1
      %v1481 = vpop.permute.xlu0 %1480
      %1482 = vrot.lane.b32.xlu0 %v1387, 1
      %v1483 = vpop.permute.xlu0 %1482
      %v1500 = vadd.f32 %v1420, %v1453
      %v1501 = vadd.f32 %v1421, %v1455
      %v1502 = vadd.f32 %v1422, %v1457
      %v1503 = vadd.f32 %v1423, %v1459
      %v1504 = vadd.f32 %v1424, %v1461
      %v1505 = vadd.f32 %v1425, %v1463
      %v1506 = vadd.f32 %v1426, %v1465
      %v1507 = vadd.f32 %v1427, %v1467
      %v1508 = vadd.f32 %v1428, %v1469
      %v1509 = vadd.f32 %v1429, %v1471
      %v1510 = vadd.f32 %v1430, %v1473
      %v1511 = vadd.f32 %v1431, %v1475
      %v1512 = vadd.f32 %v1432, %v1477
      %v1513 = vadd.f32 %v1433, %v1479
      %v1514 = vadd.f32 %v1434, %v1481
      %v1515 = vadd.f32 %v1435, %v1483
      %v1516 = vmax.f32 %v1500, 0.0
      %v1517 = vmax.f32 %v1501, 0.0
      %v1518 = vmax.f32 %v1502, 0.0
      %v1519 = vmax.f32 %v1503, 0.0
      %v1520 = vmax.f32 %v1504, 0.0
      %v1521 = vmax.f32 %v1505, 0.0
      %v1522 = vmax.f32 %v1506, 0.0
      %v1523 = vmax.f32 %v1507, 0.0
      %v1524 = vmax.f32 %v1508, 0.0
      %v1525 = vmax.f32 %v1509, 0.0
      %v1526 = vmax.f32 %v1510, 0.0
      %v1527 = vmax.f32 %v1511, 0.0
      %v1528 = vmax.f32 %v1512, 0.0
      %v1529 = vmax.f32 %v1513, 0.0
      %v1530 = vmax.f32 %v1514, 0.0
      %v1531 = vmax.f32 %v1515, 0.0
      %v1532 = vand.u32 2147483647, %v1500
      %v1533 = vand.u32 2147483647, %v1501
      %v1534 = vand.u32 2147483647, %v1502
      %v1535 = vand.u32 2147483647, %v1503
      %v1536 = vand.u32 2147483647, %v1504
      %v1537 = vand.u32 2147483647, %v1505
      %v1538 = vand.u32 2147483647, %v1506
      %v1539 = vand.u32 2147483647, %v1507
      %v1540 = vand.u32 2147483647, %v1508
      %v1541 = vand.u32 2147483647, %v1509
      %v1542 = vand.u32 2147483647, %v1510
      %v1543 = vand.u32 2147483647, %v1511
      %v1544 = vand.u32 2147483647, %v1512
      %v1545 = vand.u32 2147483647, %v1513
      %v1546 = vand.u32 2147483647, %v1514
      %v1547 = vand.u32 2147483647, %v1515
      %v1548 = vsub.f32 0.0, %v1532
      %v1549 = vsub.f32 0.0, %v1533
      %v1550 = vsub.f32 0.0, %v1534
      %v1551 = vsub.f32 0.0, %v1535
      %v1552 = vsub.f32 0.0, %v1536
      %v1553 = vsub.f32 0.0, %v1537
      %v1554 = vsub.f32 0.0, %v1538
      %v1555 = vsub.f32 0.0, %v1539
      %v1556 = vsub.f32 0.0, %v1540
      %v1557 = vsub.f32 0.0, %v1541
      %v1558 = vsub.f32 0.0, %v1542
      %v1559 = vsub.f32 0.0, %v1543
      %v1560 = vsub.f32 0.0, %v1544
      %v1561 = vsub.f32 0.0, %v1545
      %v1562 = vsub.f32 0.0, %v1546
      %v1563 = vsub.f32 0.0, %v1547
      %v1564 = vmul.f32 %v1548, 1.442695
      %v1565 = vpow.pop %v1564
      %v1566 = vmul.f32 %v1549, 1.442695
      %v1567 = vpow.pop %v1566
      %v1568 = vmul.f32 %v1550, 1.442695
      %v1569 = vpow.pop %v1568
      %v1570 = vmul.f32 %v1551, 1.442695
      %v1571 = vpow.pop %v1570
      %v1572 = vmul.f32 %v1552, 1.442695
      %v1573 = vpow.pop %v1572
      %v1574 = vmul.f32 %v1553, 1.442695
      %v1575 = vpow.pop %v1574
      %v1576 = vmul.f32 %v1554, 1.442695
      %v1577 = vpow.pop %v1576
      %v1578 = vmul.f32 %v1555, 1.442695
      %v1579 = vpow.pop %v1578
      %v1580 = vmul.f32 %v1556, 1.442695
      %v1581 = vpow.pop %v1580
      %v1582 = vmul.f32 %v1557, 1.442695
      %v1583 = vpow.pop %v1582
      %v1584 = vmul.f32 %v1558, 1.442695
      %v1585 = vpow.pop %v1584
      %v1586 = vmul.f32 %v1559, 1.442695
      %v1587 = vpow.pop %v1586
      %v1588 = vmul.f32 %v1560, 1.442695
      %v1589 = vpow.pop %v1588
      %v1590 = vmul.f32 %v1561, 1.442695
      %v1591 = vpow.pop %v1590
      %v1592 = vmul.f32 %v1562, 1.442695
      %v1593 = vpow.pop %v1592
      %v1594 = vmul.f32 %v1563, 1.442695
      %v1595 = vpow.pop %v1594
      %v1596 = vadd.f32 %v1565, 1.0
      %v1597 = vlog2.pop %v1596
      %v1598 = vmul.f32 %v1597, 0.6931472
      %v1599 = vmul.f32 -0.5, %v1565
      %v1600 = vadd.f32 %v1599, 1.0
      %v1601 = vmul.f32 %v1600, %v1565
      %v1602 = vand.u32 2147483647, %v1565
      %vm1603 = vcmp.lt.f32.partialorder %v1602, 0.0004427343
      %v1604 = vsel %vm1603, %v1601, %v1598
      %v1605 = vadd.f32 %v1567, 1.0
      %v1606 = vlog2.pop %v1605
      %v1607 = vmul.f32 %v1606, 0.6931472
      %v1608 = vmul.f32 -0.5, %v1567
      %v1609 = vadd.f32 %v1608, 1.0
      %v1610 = vmul.f32 %v1609, %v1567
      %v1611 = vand.u32 2147483647, %v1567
      %vm1612 = vcmp.lt.f32.partialorder %v1611, 0.0004427343
      %v1613 = vsel %vm1612, %v1610, %v1607
      %v1614 = vadd.f32 %v1569, 1.0
      %v1615 = vlog2.pop %v1614
      %v1616 = vmul.f32 %v1615, 0.6931472
      %v1617 = vmul.f32 -0.5, %v1569
      %v1618 = vadd.f32 %v1617, 1.0
      %v1619 = vmul.f32 %v1618, %v1569
      %v1620 = vand.u32 2147483647, %v1569
      %vm1621 = vcmp.lt.f32.partialorder %v1620, 0.0004427343
      %v1622 = vsel %vm1621, %v1619, %v1616
      %v1623 = vadd.f32 %v1571, 1.0
      %v1624 = vlog2.pop %v1623
      %v1625 = vmul.f32 %v1624, 0.6931472
      %v1626 = vmul.f32 -0.5, %v1571
      %v1627 = vadd.f32 %v1626, 1.0
      %v1628 = vmul.f32 %v1627, %v1571
      %v1629 = vand.u32 2147483647, %v1571
      %vm1630 = vcmp.lt.f32.partialorder %v1629, 0.0004427343
      %v1631 = vsel %vm1630, %v1628, %v1625
      %v1632 = vadd.f32 %v1573, 1.0
      %v1633 = vlog2.pop %v1632
      %v1634 = vmul.f32 %v1633, 0.6931472
      %v1635 = vmul.f32 -0.5, %v1573
      %v1636 = vadd.f32 %v1635, 1.0
      %v1637 = vmul.f32 %v1636, %v1573
      %v1638 = vand.u32 2147483647, %v1573
      %vm1639 = vcmp.lt.f32.partialorder %v1638, 0.0004427343
      %v1640 = vsel %vm1639, %v1637, %v1634
      %v1641 = vadd.f32 %v1575, 1.0
      %v1642 = vlog2.pop %v1641
      %v1643 = vmul.f32 %v1642, 0.6931472
      %v1644 = vmul.f32 -0.5, %v1575
      %v1645 = vadd.f32 %v1644, 1.0
      %v1646 = vmul.f32 %v1645, %v1575
      %v1647 = vand.u32 2147483647, %v1575
      %vm1648 = vcmp.lt.f32.partialorder %v1647, 0.0004427343
      %v1649 = vsel %vm1648, %v1646, %v1643
      %v1650 = vadd.f32 %v1577, 1.0
      %v1651 = vlog2.pop %v1650
      %v1652 = vmul.f32 %v1651, 0.6931472
      %v1653 = vmul.f32 -0.5, %v1577
      %v1654 = vadd.f32 %v1653, 1.0
      %v1655 = vmul.f32 %v1654, %v1577
      %v1656 = vand.u32 2147483647, %v1577
      %vm1657 = vcmp.lt.f32.partialorder %v1656, 0.0004427343
      %v1658 = vsel %vm1657, %v1655, %v1652
      %v1659 = vadd.f32 %v1579, 1.0
      %v1660 = vlog2.pop %v1659
      %v1661 = vmul.f32 %v1660, 0.6931472
      %v1662 = vmul.f32 -0.5, %v1579
      %v1663 = vadd.f32 %v1662, 1.0
      %v1664 = vmul.f32 %v1663, %v1579
      %v1665 = vand.u32 2147483647, %v1579
      %vm1666 = vcmp.lt.f32.partialorder %v1665, 0.0004427343
      %v1667 = vsel %vm1666, %v1664, %v1661
      %v1668 = vadd.f32 %v1581, 1.0
      %v1669 = vlog2.pop %v1668
      %v1670 = vmul.f32 %v1669, 0.6931472
      %v1671 = vmul.f32 -0.5, %v1581
      %v1672 = vadd.f32 %v1671, 1.0
      %v1673 = vmul.f32 %v1672, %v1581
      %v1674 = vand.u32 2147483647, %v1581
      %vm1675 = vcmp.lt.f32.partialorder %v1674, 0.0004427343
      %v1676 = vsel %vm1675, %v1673, %v1670
      %v1677 = vadd.f32 %v1583, 1.0
      %v1678 = vlog2.pop %v1677
      %v1679 = vmul.f32 %v1678, 0.6931472
      %v1680 = vmul.f32 -0.5, %v1583
      %v1681 = vadd.f32 %v1680, 1.0
      %v1682 = vmul.f32 %v1681, %v1583
      %v1683 = vand.u32 2147483647, %v1583
      %vm1684 = vcmp.lt.f32.partialorder %v1683, 0.0004427343
      %v1685 = vsel %vm1684, %v1682, %v1679
      %v1686 = vadd.f32 %v1585, 1.0
      %v1687 = vlog2.pop %v1686
      %v1688 = vmul.f32 %v1687, 0.6931472
      %v1689 = vmul.f32 -0.5, %v1585
      %v1690 = vadd.f32 %v1689, 1.0
      %v1691 = vmul.f32 %v1690, %v1585
      %v1692 = vand.u32 2147483647, %v1585
      %vm1693 = vcmp.lt.f32.partialorder %v1692, 0.0004427343
      %v1694 = vsel %vm1693, %v1691, %v1688
      %v1695 = vadd.f32 %v1587, 1.0
      %v1696 = vlog2.pop %v1695
      %v1697 = vmul.f32 %v1696, 0.6931472
      %v1698 = vmul.f32 -0.5, %v1587
      %v1699 = vadd.f32 %v1698, 1.0
      %v1700 = vmul.f32 %v1699, %v1587
      %v1701 = vand.u32 2147483647, %v1587
      %vm1702 = vcmp.lt.f32.partialorder %v1701, 0.0004427343
      %v1703 = vsel %vm1702, %v1700, %v1697
      %v1704 = vadd.f32 %v1589, 1.0
      %v1705 = vlog2.pop %v1704
      %v1706 = vmul.f32 %v1705, 0.6931472
      %v1707 = vmul.f32 -0.5, %v1589
      %v1708 = vadd.f32 %v1707, 1.0
      %v1709 = vmul.f32 %v1708, %v1589
      %v1710 = vand.u32 2147483647, %v1589
      %vm1711 = vcmp.lt.f32.partialorder %v1710, 0.0004427343
      %v1712 = vsel %vm1711, %v1709, %v1706
      %v1713 = vadd.f32 %v1591, 1.0
      %v1714 = vlog2.pop %v1713
      %v1715 = vmul.f32 %v1714, 0.6931472
      %v1716 = vmul.f32 -0.5, %v1591
      %v1717 = vadd.f32 %v1716, 1.0
      %v1718 = vmul.f32 %v1717, %v1591
      %v1719 = vand.u32 2147483647, %v1591
      %vm1720 = vcmp.lt.f32.partialorder %v1719, 0.0004427343
      %v1721 = vsel %vm1720, %v1718, %v1715
      %v1722 = vadd.f32 %v1593, 1.0
      %v1723 = vlog2.pop %v1722
      %v1724 = vmul.f32 %v1723, 0.6931472
      %v1725 = vmul.f32 -0.5, %v1593
      %v1726 = vadd.f32 %v1725, 1.0
      %v1727 = vmul.f32 %v1726, %v1593
      %v1728 = vand.u32 2147483647, %v1593
      %vm1729 = vcmp.lt.f32.partialorder %v1728, 0.0004427343
      %v1730 = vsel %vm1729, %v1727, %v1724
      %v1731 = vadd.f32 %v1595, 1.0
      %v1732 = vlog2.pop %v1731
      %v1733 = vmul.f32 %v1732, 0.6931472
      %v1734 = vmul.f32 -0.5, %v1595
      %v1735 = vadd.f32 %v1734, 1.0
      %v1736 = vmul.f32 %v1735, %v1595
      %v1737 = vand.u32 2147483647, %v1595
      %vm1738 = vcmp.lt.f32.partialorder %v1737, 0.0004427343
      %v1739 = vsel %vm1738, %v1736, %v1733
      %v1740 = vadd.f32 %v1516, %v1604
      %v1741 = vadd.f32 %v1517, %v1613
      %v1742 = vadd.f32 %v1518, %v1622
      %v1743 = vadd.f32 %v1519, %v1631
      %v1744 = vadd.f32 %v1520, %v1640
      %v1745 = vadd.f32 %v1521, %v1649
      %v1746 = vadd.f32 %v1522, %v1658
      %v1747 = vadd.f32 %v1523, %v1667
      %v1748 = vadd.f32 %v1524, %v1676
      %v1749 = vadd.f32 %v1525, %v1685
      %v1750 = vadd.f32 %v1526, %v1694
      %v1751 = vadd.f32 %v1527, %v1703
      %v1752 = vadd.f32 %v1528, %v1712
      %v1753 = vadd.f32 %v1529, %v1721
      %v1754 = vadd.f32 %v1530, %v1730
      %v1755 = vadd.f32 %v1531, %v1739
      %1772 = vrot.lane.b32.xlu0 %v1740, 127
      %v1773 = vpop.permute.xlu0 %1772
      %1774 = vrot.lane.b32.xlu0 %v1741, 127
      %v1775 = vpop.permute.xlu0 %1774
      %1776 = vrot.lane.b32.xlu0 %v1742, 127
      %v1777 = vpop.permute.xlu0 %1776
      %1778 = vrot.lane.b32.xlu0 %v1743, 127
      %v1779 = vpop.permute.xlu0 %1778
      %1780 = vrot.lane.b32.xlu0 %v1744, 127
      %v1781 = vpop.permute.xlu0 %1780
      %1782 = vrot.lane.b32.xlu0 %v1745, 127
      %v1783 = vpop.permute.xlu0 %1782
      %1784 = vrot.lane.b32.xlu0 %v1746, 127
      %v1785 = vpop.permute.xlu0 %1784
      %1786 = vrot.lane.b32.xlu0 %v1747, 127
      %v1787 = vpop.permute.xlu0 %1786
      %1788 = vrot.lane.b32.xlu0 %v1748, 127
      %v1789 = vpop.permute.xlu0 %1788
      %1790 = vrot.lane.b32.xlu0 %v1749, 127
      %v1791 = vpop.permute.xlu0 %1790
      %1792 = vrot.lane.b32.xlu0 %v1750, 127
      %v1793 = vpop.permute.xlu0 %1792
      %1794 = vrot.lane.b32.xlu0 %v1751, 127
      %v1795 = vpop.permute.xlu0 %1794
      %1796 = vrot.lane.b32.xlu0 %v1752, 127
      %v1797 = vpop.permute.xlu0 %1796
      %1798 = vrot.lane.b32.xlu0 %v1753, 127
      %v1799 = vpop.permute.xlu0 %1798
      %1800 = vrot.lane.b32.xlu0 %v1754, 127
      %v1801 = vpop.permute.xlu0 %1800
      %1802 = vrot.lane.b32.xlu0 %v1755, 127
      %v1803 = vpop.permute.xlu0 %1802
      %vm1820 = vcmask 7168
      %1821 = vst.msk [vmem:[%s265] sm:$0xff] %vm1820, %v1773
      %1822 = vst.msk [vmem:[%s265 + $0x8] sm:$0xff] %vm1820, %v1775
      %1823 = vst.msk [vmem:[%s265 + $0x10] sm:$0xff] %vm1820, %v1777
      %1824 = vst.msk [vmem:[%s265 + $0x18] sm:$0xff] %vm1820, %v1779
      %1825 = vst.msk [vmem:[%s265 + $0x20] sm:$0xff] %vm1820, %v1781
      %1826 = vst.msk [vmem:[%s265 + $0x28] sm:$0xff] %vm1820, %v1783
      %1827 = vst.msk [vmem:[%s265 + $0x30] sm:$0xff] %vm1820, %v1785
      %1828 = vst.msk [vmem:[%s265 + $0x38] sm:$0xff] %vm1820, %v1787
      %1829 = vst.msk [vmem:[%s265 + $0x40] sm:$0xff] %vm1820, %v1789
      %1830 = vst.msk [vmem:[%s265 + $0x48] sm:$0xff] %vm1820, %v1791
      %1831 = vst.msk [vmem:[%s265 + $0x50] sm:$0xff] %vm1820, %v1793
      %1832 = vst.msk [vmem:[%s265 + $0x58] sm:$0xff] %vm1820, %v1795
      %1833 = vst.msk [vmem:[%s265 + $0x60] sm:$0xff] %vm1820, %v1797
      %1834 = vst.msk [vmem:[%s265 + $0x68] sm:$0xff] %vm1820, %v1799
      %1835 = vst.msk [vmem:[%s265 + $0x70] sm:$0xff] %vm1820, %v1801
      %1836 = vst.msk [vmem:[%s265 + $0x78] sm:$0xff] %vm1820, %v1803
      %s1837 = smul.u32 16, %s15
      %p1838 = scmp.lt.s32.totalorder %s1837, 31
      %s1839 = scalar_select %p1838, %s1837, 31
      %s1840 = smul.addr %s1839, 8
      %s1841 = scalar_lea.vmem %s4, %s1840
      // Predicated region
      $region37: #{tpu_custom_call.1} parent=35 // pred_check
        %p1842 = pneg %p137
      $region38: #{tpu_custom_call.1} parent=35 // pred_check_branch
        %1844 = sbr.rel (%p1842) target = $region40
      $region39: #{tpu_custom_call.1} parent=35 // pred_region
        %s1845 = smul.u32 16, %s15
      $region40: #{tpu_custom_call.1} parent=35 // pred_fallthru
        _
    $region36: #{tpu_custom_call.1} parent=5 // pred_fallthru
      _
    %p1846 = scmp.le.s32.totalorder 2, %s10
    // Predicated region
    $region41: #{tpu_custom_call.1} parent=5 // pred_check
      %p1847 = pneg %p1846
    $region42: #{tpu_custom_call.1} parent=5 // pred_check_branch
      %1849 = sbr.rel (%p1847) target = $region44
    $region43: #{tpu_custom_call.1} parent=5 // pred_region
      %s1850 = ssub.s32 %s10, 2
      // Predicated region
      $region45: #{tpu_custom_call.1} parent=43 // pred_check
        %p1851 = pneg %p143
      $region46: #{tpu_custom_call.1} parent=43 // pred_check_branch
        %1853 = sbr.rel (%p1851) target = $region48
      $region47: #{tpu_custom_call.1} parent=43 // pred_region
        %s1854 = smul.u32 16, %s16
        %p1855 = scmp.lt.s32.totalorder %s1854, 31
        %s1856 = scalar_select %p1855, %s1854, 31
        %s1857 = smul.addr %s1856, 8
        %s1858 = scalar_lea.vmem %s4, %s1857
      $region48: #{tpu_custom_call.1} parent=43 // pred_fallthru
        _
    $region44: #{tpu_custom_call.1} parent=5 // pred_fallthru
      _
  $region6: #{tpu_custom_call.1} parent=0 // loop_footer
    %s14 = sadd.s32 1, %s10
  $region7: #{tpu_custom_call.1} parent=0 // loop_footer_branch
    %9 = sbr.rel target = $region3
  $region8: #{tpu_custom_call.1} parent=0 // loop_exit
    _

</llo_original>
